<compile_context>
chip_gen: v5e
topology: v5e:2x2
jax: 0.10.0
libtpu: 0.0.40
codegen_flags: <defaults>
</compile_context>

<pallas_src>
import jax
import jax.numpy as jnp
from jax.experimental import pallas as pl
from jax.experimental.pallas import tpu as pltpu


def _softplus(x):
    # numerically-stable softplus (matches F.softplus up to its large-x shortcut)
    return jnp.maximum(x, 0.0) + jnp.log(1.0 + jnp.exp(-jnp.abs(x)))


def _loss_kernel(x_ref, w0_ref, w1_ref, consts_ref, b2_ref, out_ref):
    R = x_ref.shape[0]          # 2B: rows [0, B) positive pairs, rows [B, 2B) negative pairs
    B = R // 2

    b0 = consts_ref[0:1, :]     # (1, H) f32
    b1 = consts_ref[1:2, :]     # (1, H) f32
    w2row = consts_ref[2:3, :]  # (1, H) f32  (lane-dense final Linear weight)

    # Layer 0: (2B, Lp+C) @ (Lp+C, H) — bf16 MXU, f32 accumulate.
    h = jnp.dot(x_ref[...], w0_ref[...], preferred_element_type=jnp.float32) + b0
    h = jnp.maximum(h, 0.0)                                               # ReLU

    # Layer 1: (2B, H) @ (H, H)
    h = jnp.dot(h.astype(w1_ref.dtype), w1_ref[...],
                preferred_element_type=jnp.float32) + b1
    h = jnp.maximum(h, 0.0)                                               # ReLU

    # Layer 2 (Linear(H, 1)): broadcast-multiply + lane reduction (no N=1 MXU push).
    d = jnp.sum(h * w2row, axis=-1, keepdims=True) + b2_ref[0, 0]         # (2B, 1)

    # loss = -(Ej - Em) = mean_i softplus(-d_pos_i) + mean_i softplus(d_neg_i)
    #      = (1/B) * sum_r softplus(sign_r * d_r);  sign = -1 on pos rows, +1 on neg rows.
    ridx = jax.lax.broadcasted_iota(jnp.int32, (R, 1), 0)
    sign = jnp.where(ridx < B, -1.0, 1.0)
    out_ref[...] = jnp.sum(_softplus(sign * d), axis=(0, 1), keepdims=True) * (1.0 / B)


def pack_discriminator_params(W0, b0, W1, b1, W2, b2, lang_dim):
    """One-time weight packing (run at parameter setup, NOT per call).

    Pads the language block of W0 from L to the next multiple of 256 (zero rows — exact),
    concatenates it with the visual block into a single bf16 layer-0 matrix, casts W1 to
    bf16, and packs the small f32 operands [b0; b1; W2^T] into one (3, H) block.
    """
    L = int(lang_dim)
    H = W1.shape[0]
    Lp = ((L + 255) // 256) * 256
    w0_lang = jnp.pad(W0[:L], ((0, Lp - L), (0, 0)))                       # (Lp, H), zero-padded
    w0_packed = jnp.concatenate([w0_lang, W0[L:]], axis=0).astype(jnp.bfloat16)  # (Lp+C, H)
    w1_packed = W1.astype(jnp.bfloat16)                                    # (H, H)
    consts = jnp.stack([b0.astype(jnp.float32),
                        b1.astype(jnp.float32),
                        W2.reshape(H).astype(jnp.float32)], axis=0)        # (3, H) f32
    b2_s = jnp.asarray(b2, jnp.float32).reshape(1, 1)                      # SMEM scalar
    return (w0_packed, w1_packed, consts, b2_s)


def loss_forward(params, language, visual):
    """params: from pack_discriminator_params. language: (B, L) f32; visual: (B, C, T) f32."""
    w0, w1, consts, b2 = params
    B, L = language.shape
    C = visual.shape[1]
    H = w1.shape[0]
    Lp = w0.shape[0] - C
    assert Lp >= L, "packed W0 is inconsistent with the language feature width"

    # Activation plumbing (tiny, fuses in XLA): AdaptiveMaxPool1d(1)+squeeze, the vis_fake
    # roll, the zero-pad of the language features, and the pos/neg row stacking.  The
    # discriminator MLP + softplus reduction run inside the Pallas kernel.
    vis = jnp.max(visual, axis=2)                                          # (B, C)
    vis_fake = jnp.concatenate([vis[1:], vis[:1]], axis=0)                 # roll(vis, -1, axis=0)
    lang_p = jnp.pad(language, ((0, 0), (0, Lp - L)))                      # (B, Lp)
    x = jnp.concatenate(
        [jnp.concatenate([lang_p, vis], axis=1),        # rows [0, B):  D(lang, vis)      (Ej)
         jnp.concatenate([lang_p, vis_fake], axis=1)],  # rows [B, 2B): D(lang, vis_fake) (Em)
        axis=0).astype(jnp.bfloat16)                                       # (2B, Lp+C)

    args = (x, w0, w1, consts, b2)
    bytes_accessed = int(sum(int(a.size) * a.dtype.itemsize for a in args) + 4)
    R = 2 * B
    flops = int(2 * R * (Lp + C) * H + 2 * R * H * H + 2 * R * H)
    cost = pl.CostEstimate(flops=flops, transcendentals=2 * R,
                           bytes_accessed=bytes_accessed)

    vmem = pl.BlockSpec(memory_space=pltpu.MemorySpace.VMEM)
    out = pl.pallas_call(
        _loss_kernel,
        out_shape=jax.ShapeDtypeStruct((1, 1), jnp.float32),
        in_specs=[vmem, vmem, vmem, vmem,
                  pl.BlockSpec(memory_space=pltpu.MemorySpace.SMEM)],
        out_specs=pl.BlockSpec(memory_space=pltpu.MemorySpace.VMEM),
        cost_estimate=cost,
    )(*args)
    return out[0, 0]


def loss_reference(language, visual, W0, b0, W1, b1, W2, b2):
    """Pure-JAX f32 mirror of the PyTorch forward (for verification)."""
    vis = jnp.max(visual, axis=2)                                    # maxpool + squeeze
    vis_fake = jnp.concatenate([vis[1:], vis[:1]], axis=0)

    def D(l, v):
        x = jnp.concatenate([l, v], axis=1)
        h = jax.nn.relu(x @ W0 + b0)
        h = jax.nn.relu(h @ W1 + b1)
        return h @ W2 + b2

    ej = jnp.mean(-_softplus(-D(language, vis)))
    em = jnp.mean(_softplus(D(language, vis_fake)))
    return -(ej - em)


if __name__ == "__main__":
    # Feature dims follow the module defaults (700 + 512 -> 512 -> 512 -> 1); small B / T.
    B, L, C, T, H = 4, 700, 512, 8, 512

    key = jax.random.PRNGKey(0)
    k_lang, k_vis, k0, k1, k2 = jax.random.split(key, 5)

    language = jax.random.normal(k_lang, (B, L), jnp.float32)
    visual = jax.random.normal(k_vis, (B, C, T), jnp.float32)

    def init_linear(k, fin, fout):
        kw, kb = jax.random.split(k)
        bound = 1.0 / jnp.sqrt(jnp.float32(fin))
        W = jax.random.uniform(kw, (fin, fout), jnp.float32, -bound, bound)
        b = jax.random.uniform(kb, (fout,), jnp.float32, -bound, bound)
        return W, b

    W0, b0 = init_linear(k0, L + C, H)   # l0: Linear(1212, 512)
    W1, b1 = init_linear(k1, H, H)       # l1: Linear(512, 512)
    W2, b2 = init_linear(k2, H, 1)       # l2: Linear(512, 1)

    # One-time weight pre-packing (kept out of the per-call hot path).
    params = pack_discriminator_params(W0, b0, W1, b1, W2, b2, L)
    params = jax.tree_util.tree_map(jax.block_until_ready, params)

    loss_fn = jax.jit(loss_forward)
    out = loss_fn(params, language, visual)
    out = jax.block_until_ready(out)

    ref = loss_reference(language, visual, W0, b0, W1, b1, W2, b2)
    # bf16 matmul feeds (f32 accumulation) -> slightly relaxed tolerance vs the f32 reference.
    assert jnp.allclose(out, ref, atol=2e-2, rtol=2e-2), (out, ref)

    print("KERNEL_OK")
</pallas_src>

<mosaic_0001>
module attributes {stable_mosaic.version = 11 : i64} {
  func.func @_loss_kernel(%arg0: memref<8x1280xbf16, #tpu.memory_space<vmem>>, %arg1: memref<1280x512xbf16, #tpu.memory_space<vmem>>, %arg2: memref<512x512xbf16, #tpu.memory_space<vmem>>, %arg3: memref<3x512xf32, #tpu.memory_space<vmem>>, %arg4: memref<1x1xf32, #tpu.memory_space<smem>>, %arg5: memref<1x1xf32, #tpu.memory_space<vmem>>) attributes {dimension_semantics = [], scalar_prefetch = 0 : i64, scratch_operands = 0 : i64, tpu.core_type = #tpu.core_type<tc>} {
    %c0 = arith.constant 0 : index
    %c0_0 = arith.constant 0 : index
    %0 = vector.load %arg3[%c0, %c0_0] : memref<3x512xf32, #tpu.memory_space<vmem>>, vector<1x512xf32>
    %c1 = arith.constant 1 : index
    %c0_1 = arith.constant 0 : index
    %1 = vector.load %arg3[%c1, %c0_1] : memref<3x512xf32, #tpu.memory_space<vmem>>, vector<1x512xf32>
    %c2 = arith.constant 2 : index
    %c0_2 = arith.constant 0 : index
    %2 = vector.load %arg3[%c2, %c0_2] : memref<3x512xf32, #tpu.memory_space<vmem>>, vector<1x512xf32>
    %c0_3 = arith.constant 0 : index
    %c0_4 = arith.constant 0 : index
    %3 = vector.load %arg0[%c0_3, %c0_4] : memref<8x1280xbf16, #tpu.memory_space<vmem>>, vector<8x1280xbf16>
    %c0_5 = arith.constant 0 : index
    %c0_6 = arith.constant 0 : index
    %4 = vector.load %arg1[%c0_5, %c0_6] : memref<1280x512xbf16, #tpu.memory_space<vmem>>, vector<1280x512xbf16>
    %cst = arith.constant dense<0.000000e+00> : vector<8x512xf32>
    %5 = tpu.matmul %3, %4, %cst {dimension_numbers = #tpu.dot_dimension_numbers<[1], [0], [0], [1], [0, 0, 1, 1], [], []>} : vector<8x1280xbf16>, vector<1280x512xbf16>, vector<8x512xf32> -> vector<8x512xf32>
    %6 = vector.broadcast %0 : vector<1x512xf32> to vector<8x512xf32>
    %7 = arith.addf %5, %6 : vector<8x512xf32>
    %cst_7 = arith.constant 0.000000e+00 : f32
    %8 = vector.broadcast %cst_7 : f32 to vector<8x512xf32>
    %9 = arith.maximumf %7, %8 : vector<8x512xf32>
    %10 = arith.truncf %9 : vector<8x512xf32> to vector<8x512xbf16>
    %c0_8 = arith.constant 0 : index
    %c0_9 = arith.constant 0 : index
    %11 = vector.load %arg2[%c0_8, %c0_9] : memref<512x512xbf16, #tpu.memory_space<vmem>>, vector<512x512xbf16>
    %cst_10 = arith.constant dense<0.000000e+00> : vector<8x512xf32>
    %12 = tpu.matmul %10, %11, %cst_10 {dimension_numbers = #tpu.dot_dimension_numbers<[1], [0], [0], [1], [0, 0, 1, 1], [], []>} : vector<8x512xbf16>, vector<512x512xbf16>, vector<8x512xf32> -> vector<8x512xf32>
    %13 = vector.broadcast %1 : vector<1x512xf32> to vector<8x512xf32>
    %14 = arith.addf %12, %13 : vector<8x512xf32>
    %cst_11 = arith.constant 0.000000e+00 : f32
    %15 = vector.broadcast %cst_11 : f32 to vector<8x512xf32>
    %16 = arith.maximumf %14, %15 : vector<8x512xf32>
    %17 = vector.broadcast %2 : vector<1x512xf32> to vector<8x512xf32>
    %18 = arith.mulf %16, %17 : vector<8x512xf32>
    %cst_12 = arith.constant dense<0.000000e+00> : vector<8xf32>
    %19 = vector.multi_reduction <add>, %18, %cst_12 [1] : vector<8x512xf32> to vector<8xf32>
    %20 = vector.shape_cast %19 : vector<8xf32> to vector<8x1xf32>
    %c0_13 = arith.constant 0 : index
    %c0_14 = arith.constant 0 : index
    %21 = memref.load %arg4[%c0_13, %c0_14] : memref<1x1xf32, #tpu.memory_space<smem>>
    %22 = vector.broadcast %21 : f32 to vector<8x1xf32>
    %23 = arith.addf %20, %22 : vector<8x1xf32>
    %24 = tpu.iota {dimensions = array<i32: 0>} : vector<8x1xi32>
    %c4_i32 = arith.constant 4 : i32
    %25 = vector.broadcast %c4_i32 : i32 to vector<8x1xi32>
    %26 = arith.cmpi slt, %24, %25 : vector<8x1xi32>
    %cst_15 = arith.constant -1.000000e+00 : f32
    %cst_16 = arith.constant 1.000000e+00 : f32
    %27 = vector.broadcast %cst_15 : f32 to vector<8x1xf32>
    %28 = vector.broadcast %cst_16 : f32 to vector<8x1xf32>
    %29 = arith.select %26, %27, %28 : vector<8x1xi1>, vector<8x1xf32>
    %30 = arith.mulf %29, %23 : vector<8x1xf32>
    %cst_17 = arith.constant 0.000000e+00 : f32
    %31 = vector.broadcast %cst_17 : f32 to vector<8x1xf32>
    %32 = arith.maximumf %30, %31 : vector<8x1xf32>
    %33 = math.absf %30 : vector<8x1xf32>
    %cst_18 = arith.constant 0.000000e+00 : f32
    %34 = vector.broadcast %cst_18 : f32 to vector<8x1xf32>
    %35 = arith.subf %34, %33 : vector<8x1xf32>
    %36 = math.exp %35 : vector<8x1xf32>
    %cst_19 = arith.constant 1.000000e+00 : f32
    %37 = vector.broadcast %cst_19 : f32 to vector<8x1xf32>
    %38 = arith.addf %37, %36 : vector<8x1xf32>
    %39 = math.log %38 : vector<8x1xf32>
    %40 = arith.addf %32, %39 : vector<8x1xf32>
    %41 = vector.shape_cast %40 : vector<8x1xf32> to vector<1x8x1xf32>
    %cst_20 = arith.constant dense<0.000000e+00> : vector<1xf32>
    %42 = vector.multi_reduction <add>, %41, %cst_20 [1, 2] : vector<1x8x1xf32> to vector<1xf32>
    %43 = vector.shape_cast %42 : vector<1xf32> to vector<1x1x1xf32>
    %44 = vector.extract %43[0, 0, 0] : f32 from vector<1x1x1xf32>
    %45 = vector.broadcast %44 : f32 to vector<1x1xf32>
    %cst_21 = arith.constant 2.500000e-01 : f32
    %46 = vector.broadcast %cst_21 : f32 to vector<1x1xf32>
    %47 = arith.mulf %45, %46 : vector<1x1xf32>
    %c0_22 = arith.constant 0 : index
    %c0_23 = arith.constant 0 : index
    %48 = vector.load %arg5[%c0_22, %c0_23] : memref<1x1xf32, #tpu.memory_space<vmem>>, vector<1x1xf32>
    tpu.vector_store %arg5[%c0_22, %c0_23], %47 {strides = array<i32>} : memref<1x1xf32, #tpu.memory_space<vmem>>, vector<1x1xf32>,
    return
  }
}

</mosaic_0001>

<llo_original>
// kernel: loss_forward.1
$region0: #{loss_forward.1}
  #allocation0 [shape = 'u32[]', space=smem, size = 0x4, offset = 0x4, fixed_abs, tag = 'smem constant byte address 0x4 - core index']
  #allocation1 [shape = 'u32[72,128]{1,0:T(1,128)}', space=vmem, size = 0x9000, scoped, tag = 'internal scratch']
  #allocation2 [shape = 'f32[1,1]{1,0:T(1,128)S(6)}', space=smem, size = 0x200, scoped, tag = 'scoped memory for loss_forward.1']
  %s0 = inlined_call_operand.vmem [shape: bf16[8,1280], index: 0, kind: input, shape index: {}]
  %s1 = inlined_call_operand.hbm [shape: bf16[1280,512], index: 1, kind: input, shape index: {}]
  %s2 = inlined_call_operand.hbm [shape: bf16[512,512], index: 2, kind: input, shape index: {}]
  %s3 = inlined_call_operand.hbm [shape: f32[3,512], index: 3, kind: input, shape index: {}]
  %s4 = inlined_call_operand.<no memory space> [shape: f32[1,1], index: 4, kind: input, shape index: {}]
  %s5 = inlined_call_operand.hbm [shape: f32[1,1], index: 5, kind: output, shape index: {}]
  %s6 = sld [smem:[#allocation0]]
  $region42: #{loss_forward.1} parent=0
    _
  %s8 = ssub.s32 1, %s6
  %s9 = scalar_select 0, %s8, %s6
  %10 = sst [smem:[#allocation2]] %s4
  $region1: #{loss_forward.1} parent=0
    #allocation3 [shape = 'u8[1310720]{0}', space=vmem, size = 0x140000, scoped, tag = 'input window, operand 1, single buffered']
    #allocation4 [shape = 's32[1]{0}', space=sflag, size = 0x4, scoped, tag = 'scoped memory for loss_forward.1']
    #allocation5 [shape = 's32[1]{0}', space=sflag, size = 0x4, scoped, tag = 'scoped memory for loss_forward.1']
    #allocation6 [shape = 'u8[524288]{0}', space=vmem, size = 0x80000, scoped, tag = 'input window, operand 2, single buffered']
    #allocation7 [shape = 's32[1]{0}', space=sflag, size = 0x4, scoped, tag = 'scoped memory for loss_forward.1']
    #allocation8 [shape = 'u8[8192]{0}', space=vmem, size = 0x2000, scoped, tag = 'input window, operand 3, single buffered']
    #allocation9 [shape = 'u8[512]{0}', space=vmem, size = 0x400, scoped, tag = 'output window, operand 0, single buffered']
    %11 = vsyncpa [#allocation4], 0
    %12 = vsyncpa [#allocation7], 0
    %13 = vsyncpa [#allocation5], 0
    // Predicated region
    $region2: #{loss_forward.1} parent=1 // pred_check
      _
    $region3: #{loss_forward.1} parent=1 // pred_check_branch
      %15 = sbr.rel (0) target = $region5
    $region4: #{loss_forward.1} parent=1 // pred_region
      _
    $region5: #{loss_forward.1} parent=1 // pred_fallthru
      _
    // Predicated region
    $region6: #{loss_forward.1} parent=1 // pred_check
      _
    $region7: #{loss_forward.1} parent=1 // pred_check_branch
      %17 = sbr.rel (0) target = $region9
    $region8: #{loss_forward.1} parent=1 // pred_region
      %19 = vsyncadd [#allocation4], 0
      %s20 = sshll.u32 %s1, 4
      %s21 = int_to_ptr.hbm [resolvable:$true] %s20
      %s22 = sshll.u32 [#allocation3], 4
      %s23 = int_to_ptr.vmem [resolvable:$true] %s22
      %28 = dma.hbm_to_vmem [thread:$0]  %s21, 40960, %s23, [#allocation4], 256, 256, 16
    $region9: #{loss_forward.1} parent=1 // pred_fallthru
      _
    // Predicated region
    $region10: #{loss_forward.1} parent=1 // pred_check
      _
    $region11: #{loss_forward.1} parent=1 // pred_check_branch
      %30 = sbr.rel (0) target = $region13
    $region12: #{loss_forward.1} parent=1 // pred_region
      %32 = vsyncadd [#allocation7], 0
      %s33 = sshll.u32 %s2, 4
      %s34 = int_to_ptr.hbm [resolvable:$true] %s33
      %s35 = sshll.u32 [#allocation6], 4
      %s36 = int_to_ptr.vmem [resolvable:$true] %s35
      %41 = dma.hbm_to_vmem [thread:$0]  %s34, 16384, %s36, [#allocation7], 256, 256, 16
    $region13: #{loss_forward.1} parent=1 // pred_fallthru
      _
    // Predicated region
    $region14: #{loss_forward.1} parent=1 // pred_check
      _
    $region15: #{loss_forward.1} parent=1 // pred_check_branch
      %43 = sbr.rel (0) target = $region17
    $region16: #{loss_forward.1} parent=1 // pred_region
      %45 = vsyncadd [#allocation7], 0
      %s47 = sshll.u32 %s3, 4
      %s48 = int_to_ptr.hbm [resolvable:$true] %s47
      %s49 = sshll.u32 [#allocation8], 4
      %s50 = int_to_ptr.vmem [resolvable:$true] %s49
      %52 = dma.hbm_to_vmem [thread:$0]  %s48, 256, %s50, [#allocation7]
    $region17: #{loss_forward.1} parent=1 // pred_fallthru
      _
    // Predicated region
    $region18: #{loss_forward.1} parent=1 // pred_check
      _
    $region19: #{loss_forward.1} parent=1 // pred_check_branch
      %54 = sbr.rel (0) target = $region21
    $region20: #{loss_forward.1} parent=1 // pred_region
      _
    $region21: #{loss_forward.1} parent=1 // pred_fallthru
      _
    // Predicated region
    $region22: #{loss_forward.1} parent=1 // pred_check
      _
    $region23: #{loss_forward.1} parent=1 // pred_check_branch
      %56 = sbr.rel (0) target = $region25
    $region24: #{loss_forward.1} parent=1 // pred_region
      %58 = dma.done [#allocation4], 40960
    $region25: #{loss_forward.1} parent=1 // pred_fallthru
      _
    // Predicated region
    $region26: #{loss_forward.1} parent=1 // pred_check
      _
    $region27: #{loss_forward.1} parent=1 // pred_check_branch
      %60 = sbr.rel (0) target = $region29
    $region28: #{loss_forward.1} parent=1 // pred_region
      %62 = dma.done [#allocation7], 16384
    $region29: #{loss_forward.1} parent=1 // pred_fallthru
      _
    // Predicated region
    $region30: #{loss_forward.1} parent=1 // pred_check
      _
    $region31: #{loss_forward.1} parent=1 // pred_check_branch
      %64 = sbr.rel (0) target = $region33
    $region32: #{loss_forward.1} parent=1 // pred_region
      %66 = dma.done [#allocation7], 256
    $region33: #{loss_forward.1} parent=1 // pred_fallthru
      _
    %v67 = vld [vmem:[#allocation8] ss:$4 sm:$0xf]
    %s68 = scalar_lea.vmem [#allocation8], 1
    %v69 = vld [vmem:[%s68] ss:$4 sm:$0xf]
    %s70 = scalar_lea.vmem [#allocation8], 2
    %v71 = vld [vmem:[%s70] ss:$4 sm:$0xf]
    %v72 = vld [vmem:[%s0] sm:$0xff]
    %v73 = vld [vmem:[%s0 + $0x8] sm:$0xff]
    %v74 = vld [vmem:[%s0 + $0x10] sm:$0xff]
    %v75 = vld [vmem:[%s0 + $0x18] sm:$0xff]
    %v76 = vld [vmem:[%s0 + $0x20] sm:$0xff]
    %v77 = vld [vmem:[#allocation3] sm:$0xff]
    %v78 = vld [vmem:[#allocation3 + $0x8] sm:$0xff]
    %v79 = vld [vmem:[#allocation3 + $0x10] sm:$0xff]
    %v80 = vld [vmem:[#allocation3 + $0x18] sm:$0xff]
    %v81 = vld [vmem:[#allocation3 + $0x20] sm:$0xff]
    %v82 = vld [vmem:[#allocation3 + $0x28] sm:$0xff]
    %v83 = vld [vmem:[#allocation3 + $0x30] sm:$0xff]
    %v84 = vld [vmem:[#allocation3 + $0x38] sm:$0xff]
    %v85 = vld [vmem:[#allocation3 + $0x40] sm:$0xff]
    %v86 = vld [vmem:[#allocation3 + $0x48] sm:$0xff]
    %v87 = vld [vmem:[#allocation3 + $0x50] sm:$0xff]
    %v88 = vld [vmem:[#allocation3 + $0x58] sm:$0xff]
    %v89 = vld [vmem:[#allocation3 + $0x60] sm:$0xff]
    %v90 = vld [vmem:[#allocation3 + $0x68] sm:$0xff]
    %v91 = vld [vmem:[#allocation3 + $0x70] sm:$0xff]
    %v92 = vld [vmem:[#allocation3 + $0x78] sm:$0xff]
    %v93 = vld [vmem:[#allocation3 + $0x80] sm:$0xff]
    %v94 = vld [vmem:[#allocation3 + $0x88] sm:$0xff]
    %v95 = vld [vmem:[#allocation3 + $0x90] sm:$0xff]
    %v96 = vld [vmem:[#allocation3 + $0x98] sm:$0xff]
    %v97 = vld [vmem:[#allocation3 + $0xa0] sm:$0xff]
    %v98 = vld [vmem:[#allocation3 + $0xa8] sm:$0xff]
    %v99 = vld [vmem:[#allocation3 + $0xb0] sm:$0xff]
    %v100 = vld [vmem:[#allocation3 + $0xb8] sm:$0xff]
    %v101 = vld [vmem:[#allocation3 + $0xc0] sm:$0xff]
    %v102 = vld [vmem:[#allocation3 + $0xc8] sm:$0xff]
    %v103 = vld [vmem:[#allocation3 + $0xd0] sm:$0xff]
    %v104 = vld [vmem:[#allocation3 + $0xd8] sm:$0xff]
    %v105 = vld [vmem:[#allocation3 + $0xe0] sm:$0xff]
    %v106 = vld [vmem:[#allocation3 + $0xe8] sm:$0xff]
    %v107 = vld [vmem:[#allocation3 + $0xf0] sm:$0xff]
    %v108 = vld [vmem:[#allocation3 + $0xf8] sm:$0xff]
    %v109 = vld [vmem:[#allocation3 + $0x100] sm:$0xff]
    %v110 = vld [vmem:[#allocation3 + $0x108] sm:$0xff]
    %v111 = vld [vmem:[#allocation3 + $0x110] sm:$0xff]
    %v112 = vld [vmem:[#allocation3 + $0x118] sm:$0xff]
    %v113 = vld [vmem:[#allocation3 + $0x120] sm:$0xff]
    %v114 = vld [vmem:[#allocation3 + $0x128] sm:$0xff]
    %v115 = vld [vmem:[#allocation3 + $0x130] sm:$0xff]
    %v116 = vld [vmem:[#allocation3 + $0x138] sm:$0xff]
    %v117 = vld [vmem:[#allocation3 + $0x140] sm:$0xff]
    %v118 = vld [vmem:[#allocation3 + $0x148] sm:$0xff]
    %v119 = vld [vmem:[#allocation3 + $0x150] sm:$0xff]
    %v120 = vld [vmem:[#allocation3 + $0x158] sm:$0xff]
    %v121 = vld [vmem:[#allocation3 + $0x160] sm:$0xff]
    %v122 = vld [vmem:[#allocation3 + $0x168] sm:$0xff]
    %v123 = vld [vmem:[#allocation3 + $0x170] sm:$0xff]
    %v124 = vld [vmem:[#allocation3 + $0x178] sm:$0xff]
    %v125 = vld [vmem:[#allocation3 + $0x180] sm:$0xff]
    %v126 = vld [vmem:[#allocation3 + $0x188] sm:$0xff]
    %v127 = vld [vmem:[#allocation3 + $0x190] sm:$0xff]
    %v128 = vld [vmem:[#allocation3 + $0x198] sm:$0xff]
    %v129 = vld [vmem:[#allocation3 + $0x1a0] sm:$0xff]
    %v130 = vld [vmem:[#allocation3 + $0x1a8] sm:$0xff]
    %v131 = vld [vmem:[#allocation3 + $0x1b0] sm:$0xff]
    %v132 = vld [vmem:[#allocation3 + $0x1b8] sm:$0xff]
    %v133 = vld [vmem:[#allocation3 + $0x1c0] sm:$0xff]
    %v134 = vld [vmem:[#allocation3 + $0x1c8] sm:$0xff]
    %v135 = vld [vmem:[#allocation3 + $0x1d0] sm:$0xff]
    %v136 = vld [vmem:[#allocation3 + $0x1d8] sm:$0xff]
    %v137 = vld [vmem:[#allocation3 + $0x1e0] sm:$0xff]
    %v138 = vld [vmem:[#allocation3 + $0x1e8] sm:$0xff]
    %v139 = vld [vmem:[#allocation3 + $0x1f0] sm:$0xff]
    %v140 = vld [vmem:[#allocation3 + $0x1f8] sm:$0xff]
    %v141 = vld [vmem:[#allocation3 + $0x200] sm:$0xff]
    %v142 = vld [vmem:[#allocation3 + $0x208] sm:$0xff]
    %v143 = vld [vmem:[#allocation3 + $0x210] sm:$0xff]
    %v144 = vld [vmem:[#allocation3 + $0x218] sm:$0xff]
    %v145 = vld [vmem:[#allocation3 + $0x220] sm:$0xff]
    %v146 = vld [vmem:[#allocation3 + $0x228] sm:$0xff]
    %v147 = vld [vmem:[#allocation3 + $0x230] sm:$0xff]
    %v148 = vld [vmem:[#allocation3 + $0x238] sm:$0xff]
    %v149 = vld [vmem:[#allocation3 + $0x240] sm:$0xff]
    %v150 = vld [vmem:[#allocation3 + $0x248] sm:$0xff]
    %v151 = vld [vmem:[#allocation3 + $0x250] sm:$0xff]
    %v152 = vld [vmem:[#allocation3 + $0x258] sm:$0xff]
    %v153 = vld [vmem:[#allocation3 + $0x260] sm:$0xff]
    %v154 = vld [vmem:[#allocation3 + $0x268] sm:$0xff]
    %v155 = vld [vmem:[#allocation3 + $0x270] sm:$0xff]
    %v156 = vld [vmem:[#allocation3 + $0x278] sm:$0xff]
    %v157 = vld [vmem:[#allocation3 + $0x280] sm:$0xff]
    %v158 = vld [vmem:[#allocation3 + $0x288] sm:$0xff]
    %v159 = vld [vmem:[#allocation3 + $0x290] sm:$0xff]
    %v160 = vld [vmem:[#allocation3 + $0x298] sm:$0xff]
    %v161 = vld [vmem:[#allocation3 + $0x2a0] sm:$0xff]
    %v162 = vld [vmem:[#allocation3 + $0x2a8] sm:$0xff]
    %v163 = vld [vmem:[#allocation3 + $0x2b0] sm:$0xff]
    %v164 = vld [vmem:[#allocation3 + $0x2b8] sm:$0xff]
    %v165 = vld [vmem:[#allocation3 + $0x2c0] sm:$0xff]
    %v166 = vld [vmem:[#allocation3 + $0x2c8] sm:$0xff]
    %v167 = vld [vmem:[#allocation3 + $0x2d0] sm:$0xff]
    %v168 = vld [vmem:[#allocation3 + $0x2d8] sm:$0xff]
    %v169 = vld [vmem:[#allocation3 + $0x2e0] sm:$0xff]
    %v170 = vld [vmem:[#allocation3 + $0x2e8] sm:$0xff]
    %v171 = vld [vmem:[#allocation3 + $0x2f0] sm:$0xff]
    %v172 = vld [vmem:[#allocation3 + $0x2f8] sm:$0xff]
    %v173 = vld [vmem:[#allocation3 + $0x300] sm:$0xff]
    %v174 = vld [vmem:[#allocation3 + $0x308] sm:$0xff]
    %v175 = vld [vmem:[#allocation3 + $0x310] sm:$0xff]
    %v176 = vld [vmem:[#allocation3 + $0x318] sm:$0xff]
    %v177 = vld [vmem:[#allocation3 + $0x320] sm:$0xff]
    %v178 = vld [vmem:[#allocation3 + $0x328] sm:$0xff]
    %v179 = vld [vmem:[#allocation3 + $0x330] sm:$0xff]
    %v180 = vld [vmem:[#allocation3 + $0x338] sm:$0xff]
    %v181 = vld [vmem:[#allocation3 + $0x340] sm:$0xff]
    %v182 = vld [vmem:[#allocation3 + $0x348] sm:$0xff]
    %v183 = vld [vmem:[#allocation3 + $0x350] sm:$0xff]
    %v184 = vld [vmem:[#allocation3 + $0x358] sm:$0xff]
    %v185 = vld [vmem:[#allocation3 + $0x360] sm:$0xff]
    %v186 = vld [vmem:[#allocation3 + $0x368] sm:$0xff]
    %v187 = vld [vmem:[#allocation3 + $0x370] sm:$0xff]
    %v188 = vld [vmem:[#allocation3 + $0x378] sm:$0xff]
    %v189 = vld [vmem:[#allocation3 + $0x380] sm:$0xff]
    %v190 = vld [vmem:[#allocation3 + $0x388] sm:$0xff]
    %v191 = vld [vmem:[#allocation3 + $0x390] sm:$0xff]
    %v192 = vld [vmem:[#allocation3 + $0x398] sm:$0xff]
    %v193 = vld [vmem:[#allocation3 + $0x3a0] sm:$0xff]
    %v194 = vld [vmem:[#allocation3 + $0x3a8] sm:$0xff]
    %v195 = vld [vmem:[#allocation3 + $0x3b0] sm:$0xff]
    %v196 = vld [vmem:[#allocation3 + $0x3b8] sm:$0xff]
    %v197 = vld [vmem:[#allocation3 + $0x3c0] sm:$0xff]
    %v198 = vld [vmem:[#allocation3 + $0x3c8] sm:$0xff]
    %v199 = vld [vmem:[#allocation3 + $0x3d0] sm:$0xff]
    %v200 = vld [vmem:[#allocation3 + $0x3d8] sm:$0xff]
    %v201 = vld [vmem:[#allocation3 + $0x3e0] sm:$0xff]
    %v202 = vld [vmem:[#allocation3 + $0x3e8] sm:$0xff]
    %v203 = vld [vmem:[#allocation3 + $0x3f0] sm:$0xff]
    %v204 = vld [vmem:[#allocation3 + $0x3f8] sm:$0xff]
    %v205 = vld [vmem:[#allocation3 + $0x400] sm:$0xff]
    %v206 = vld [vmem:[#allocation3 + $0x408] sm:$0xff]
    %v207 = vld [vmem:[#allocation3 + $0x410] sm:$0xff]
    %v208 = vld [vmem:[#allocation3 + $0x418] sm:$0xff]
    %v209 = vld [vmem:[#allocation3 + $0x420] sm:$0xff]
    %v210 = vld [vmem:[#allocation3 + $0x428] sm:$0xff]
    %v211 = vld [vmem:[#allocation3 + $0x430] sm:$0xff]
    %v212 = vld [vmem:[#allocation3 + $0x438] sm:$0xff]
    %v213 = vld [vmem:[#allocation3 + $0x440] sm:$0xff]
    %v214 = vld [vmem:[#allocation3 + $0x448] sm:$0xff]
    %v215 = vld [vmem:[#allocation3 + $0x450] sm:$0xff]
    %v216 = vld [vmem:[#allocation3 + $0x458] sm:$0xff]
    %v217 = vld [vmem:[#allocation3 + $0x460] sm:$0xff]
    %v218 = vld [vmem:[#allocation3 + $0x468] sm:$0xff]
    %v219 = vld [vmem:[#allocation3 + $0x470] sm:$0xff]
    %v220 = vld [vmem:[#allocation3 + $0x478] sm:$0xff]
    %v221 = vld [vmem:[#allocation3 + $0x480] sm:$0xff]
    %v222 = vld [vmem:[#allocation3 + $0x488] sm:$0xff]
    %v223 = vld [vmem:[#allocation3 + $0x490] sm:$0xff]
    %v224 = vld [vmem:[#allocation3 + $0x498] sm:$0xff]
    %v225 = vld [vmem:[#allocation3 + $0x4a0] sm:$0xff]
    %v226 = vld [vmem:[#allocation3 + $0x4a8] sm:$0xff]
    %v227 = vld [vmem:[#allocation3 + $0x4b0] sm:$0xff]
    %v228 = vld [vmem:[#allocation3 + $0x4b8] sm:$0xff]
    %v229 = vld [vmem:[#allocation3 + $0x4c0] sm:$0xff]
    %v230 = vld [vmem:[#allocation3 + $0x4c8] sm:$0xff]
    %v231 = vld [vmem:[#allocation3 + $0x4d0] sm:$0xff]
    %v232 = vld [vmem:[#allocation3 + $0x4d8] sm:$0xff]
    %v233 = vld [vmem:[#allocation3 + $0x4e0] sm:$0xff]
    %v234 = vld [vmem:[#allocation3 + $0x4e8] sm:$0xff]
    %v235 = vld [vmem:[#allocation3 + $0x4f0] sm:$0xff]
    %v236 = vld [vmem:[#allocation3 + $0x4f8] sm:$0xff]
    %v237 = vld [vmem:[#allocation3 + $0x500] sm:$0xff]
    %v238 = vld [vmem:[#allocation3 + $0x508] sm:$0xff]
    %v239 = vld [vmem:[#allocation3 + $0x510] sm:$0xff]
    %v240 = vld [vmem:[#allocation3 + $0x518] sm:$0xff]
    %v241 = vld [vmem:[#allocation3 + $0x520] sm:$0xff]
    %v242 = vld [vmem:[#allocation3 + $0x528] sm:$0xff]
    %v243 = vld [vmem:[#allocation3 + $0x530] sm:$0xff]
    %v244 = vld [vmem:[#allocation3 + $0x538] sm:$0xff]
    %v245 = vld [vmem:[#allocation3 + $0x540] sm:$0xff]
    %v246 = vld [vmem:[#allocation3 + $0x548] sm:$0xff]
    %v247 = vld [vmem:[#allocation3 + $0x550] sm:$0xff]
    %v248 = vld [vmem:[#allocation3 + $0x558] sm:$0xff]
    %v249 = vld [vmem:[#allocation3 + $0x560] sm:$0xff]
    %v250 = vld [vmem:[#allocation3 + $0x568] sm:$0xff]
    %v251 = vld [vmem:[#allocation3 + $0x570] sm:$0xff]
    %v252 = vld [vmem:[#allocation3 + $0x578] sm:$0xff]
    %v253 = vld [vmem:[#allocation3 + $0x580] sm:$0xff]
    %v254 = vld [vmem:[#allocation3 + $0x588] sm:$0xff]
    %v255 = vld [vmem:[#allocation3 + $0x590] sm:$0xff]
    %v256 = vld [vmem:[#allocation3 + $0x598] sm:$0xff]
    %v257 = vld [vmem:[#allocation3 + $0x5a0] sm:$0xff]
    %v258 = vld [vmem:[#allocation3 + $0x5a8] sm:$0xff]
    %v259 = vld [vmem:[#allocation3 + $0x5b0] sm:$0xff]
    %v260 = vld [vmem:[#allocation3 + $0x5b8] sm:$0xff]
    %v261 = vld [vmem:[#allocation3 + $0x5c0] sm:$0xff]
    %v262 = vld [vmem:[#allocation3 + $0x5c8] sm:$0xff]
    %v263 = vld [vmem:[#allocation3 + $0x5d0] sm:$0xff]
    %v264 = vld [vmem:[#allocation3 + $0x5d8] sm:$0xff]
    %v265 = vld [vmem:[#allocation3 + $0x5e0] sm:$0xff]
    %v266 = vld [vmem:[#allocation3 + $0x5e8] sm:$0xff]
    %v267 = vld [vmem:[#allocation3 + $0x5f0] sm:$0xff]
    %v268 = vld [vmem:[#allocation3 + $0x5f8] sm:$0xff]
    %v269 = vld [vmem:[#allocation3 + $0x600] sm:$0xff]
    %v270 = vld [vmem:[#allocation3 + $0x608] sm:$0xff]
    %v271 = vld [vmem:[#allocation3 + $0x610] sm:$0xff]
    %v272 = vld [vmem:[#allocation3 + $0x618] sm:$0xff]
    %v273 = vld [vmem:[#allocation3 + $0x620] sm:$0xff]
    %v274 = vld [vmem:[#allocation3 + $0x628] sm:$0xff]
    %v275 = vld [vmem:[#allocation3 + $0x630] sm:$0xff]
    %v276 = vld [vmem:[#allocation3 + $0x638] sm:$0xff]
    %v277 = vld [vmem:[#allocation3 + $0x640] sm:$0xff]
    %v278 = vld [vmem:[#allocation3 + $0x648] sm:$0xff]
    %v279 = vld [vmem:[#allocation3 + $0x650] sm:$0xff]
    %v280 = vld [vmem:[#allocation3 + $0x658] sm:$0xff]
    %v281 = vld [vmem:[#allocation3 + $0x660] sm:$0xff]
    %v282 = vld [vmem:[#allocation3 + $0x668] sm:$0xff]
    %v283 = vld [vmem:[#allocation3 + $0x670] sm:$0xff]
    %v284 = vld [vmem:[#allocation3 + $0x678] sm:$0xff]
    %v285 = vld [vmem:[#allocation3 + $0x680] sm:$0xff]
    %v286 = vld [vmem:[#allocation3 + $0x688] sm:$0xff]
    %v287 = vld [vmem:[#allocation3 + $0x690] sm:$0xff]
    %v288 = vld [vmem:[#allocation3 + $0x698] sm:$0xff]
    %v289 = vld [vmem:[#allocation3 + $0x6a0] sm:$0xff]
    %v290 = vld [vmem:[#allocation3 + $0x6a8] sm:$0xff]
    %v291 = vld [vmem:[#allocation3 + $0x6b0] sm:$0xff]
    %v292 = vld [vmem:[#allocation3 + $0x6b8] sm:$0xff]
    %v293 = vld [vmem:[#allocation3 + $0x6c0] sm:$0xff]
    %v294 = vld [vmem:[#allocation3 + $0x6c8] sm:$0xff]
    %v295 = vld [vmem:[#allocation3 + $0x6d0] sm:$0xff]
    %v296 = vld [vmem:[#allocation3 + $0x6d8] sm:$0xff]
    %v297 = vld [vmem:[#allocation3 + $0x6e0] sm:$0xff]
    %v298 = vld [vmem:[#allocation3 + $0x6e8] sm:$0xff]
    %v299 = vld [vmem:[#allocation3 + $0x6f0] sm:$0xff]
    %v300 = vld [vmem:[#allocation3 + $0x6f8] sm:$0xff]
    %v301 = vld [vmem:[#allocation3 + $0x700] sm:$0xff]
    %v302 = vld [vmem:[#allocation3 + $0x708] sm:$0xff]
    %v303 = vld [vmem:[#allocation3 + $0x710] sm:$0xff]
    %v304 = vld [vmem:[#allocation3 + $0x718] sm:$0xff]
    %v305 = vld [vmem:[#allocation3 + $0x720] sm:$0xff]
    %v306 = vld [vmem:[#allocation3 + $0x728] sm:$0xff]
    %v307 = vld [vmem:[#allocation3 + $0x730] sm:$0xff]
    %v308 = vld [vmem:[#allocation3 + $0x738] sm:$0xff]
    %v309 = vld [vmem:[#allocation3 + $0x740] sm:$0xff]
    %v310 = vld [vmem:[#allocation3 + $0x748] sm:$0xff]
    %v311 = vld [vmem:[#allocation3 + $0x750] sm:$0xff]
    %v312 = vld [vmem:[#allocation3 + $0x758] sm:$0xff]
    %v313 = vld [vmem:[#allocation3 + $0x760] sm:$0xff]
    %v314 = vld [vmem:[#allocation3 + $0x768] sm:$0xff]
    %v315 = vld [vmem:[#allocation3 + $0x770] sm:$0xff]
    %v316 = vld [vmem:[#allocation3 + $0x778] sm:$0xff]
    %v317 = vld [vmem:[#allocation3 + $0x780] sm:$0xff]
    %v318 = vld [vmem:[#allocation3 + $0x788] sm:$0xff]
    %v319 = vld [vmem:[#allocation3 + $0x790] sm:$0xff]
    %v320 = vld [vmem:[#allocation3 + $0x798] sm:$0xff]
    %v321 = vld [vmem:[#allocation3 + $0x7a0] sm:$0xff]
    %v322 = vld [vmem:[#allocation3 + $0x7a8] sm:$0xff]
    %v323 = vld [vmem:[#allocation3 + $0x7b0] sm:$0xff]
    %v324 = vld [vmem:[#allocation3 + $0x7b8] sm:$0xff]
    %v325 = vld [vmem:[#allocation3 + $0x7c0] sm:$0xff]
    %v326 = vld [vmem:[#allocation3 + $0x7c8] sm:$0xff]
    %v327 = vld [vmem:[#allocation3 + $0x7d0] sm:$0xff]
    %v328 = vld [vmem:[#allocation3 + $0x7d8] sm:$0xff]
    %v329 = vld [vmem:[#allocation3 + $0x7e0] sm:$0xff]
    %v330 = vld [vmem:[#allocation3 + $0x7e8] sm:$0xff]
    %v331 = vld [vmem:[#allocation3 + $0x7f0] sm:$0xff]
    %v332 = vld [vmem:[#allocation3 + $0x7f8] sm:$0xff]
    %v333 = vld [vmem:[#allocation3 + $0x800] sm:$0xff]
    %v334 = vld [vmem:[#allocation3 + $0x808] sm:$0xff]
    %v335 = vld [vmem:[#allocation3 + $0x810] sm:$0xff]
    %v336 = vld [vmem:[#allocation3 + $0x818] sm:$0xff]
    %v337 = vld [vmem:[#allocation3 + $0x820] sm:$0xff]
    %v338 = vld [vmem:[#allocation3 + $0x828] sm:$0xff]
    %v339 = vld [vmem:[#allocation3 + $0x830] sm:$0xff]
    %v340 = vld [vmem:[#allocation3 + $0x838] sm:$0xff]
    %v341 = vld [vmem:[#allocation3 + $0x840] sm:$0xff]
    %v342 = vld [vmem:[#allocation3 + $0x848] sm:$0xff]
    %v343 = vld [vmem:[#allocation3 + $0x850] sm:$0xff]
    %v344 = vld [vmem:[#allocation3 + $0x858] sm:$0xff]
    %v345 = vld [vmem:[#allocation3 + $0x860] sm:$0xff]
    %v346 = vld [vmem:[#allocation3 + $0x868] sm:$0xff]
    %v347 = vld [vmem:[#allocation3 + $0x870] sm:$0xff]
    %v348 = vld [vmem:[#allocation3 + $0x878] sm:$0xff]
    %v349 = vld [vmem:[#allocation3 + $0x880] sm:$0xff]
    %v350 = vld [vmem:[#allocation3 + $0x888] sm:$0xff]
    %v351 = vld [vmem:[#allocation3 + $0x890] sm:$0xff]
    %v352 = vld [vmem:[#allocation3 + $0x898] sm:$0xff]
    %v353 = vld [vmem:[#allocation3 + $0x8a0] sm:$0xff]
    %v354 = vld [vmem:[#allocation3 + $0x8a8] sm:$0xff]
    %v355 = vld [vmem:[#allocation3 + $0x8b0] sm:$0xff]
    %v356 = vld [vmem:[#allocation3 + $0x8b8] sm:$0xff]
    %v357 = vld [vmem:[#allocation3 + $0x8c0] sm:$0xff]
    %v358 = vld [vmem:[#allocation3 + $0x8c8] sm:$0xff]
    %v359 = vld [vmem:[#allocation3 + $0x8d0] sm:$0xff]
    %v360 = vld [vmem:[#allocation3 + $0x8d8] sm:$0xff]
    %v361 = vld [vmem:[#allocation3 + $0x8e0] sm:$0xff]
    %v362 = vld [vmem:[#allocation3 + $0x8e8] sm:$0xff]
    %v363 = vld [vmem:[#allocation3 + $0x8f0] sm:$0xff]
    %v364 = vld [vmem:[#allocation3 + $0x8f8] sm:$0xff]
    %v365 = vld [vmem:[#allocation3 + $0x900] sm:$0xff]
    %v366 = vld [vmem:[#allocation3 + $0x908] sm:$0xff]
    %v367 = vld [vmem:[#allocation3 + $0x910] sm:$0xff]
    %v368 = vld [vmem:[#allocation3 + $0x918] sm:$0xff]
    %v369 = vld [vmem:[#allocation3 + $0x920] sm:$0xff]
    %v370 = vld [vmem:[#allocation3 + $0x928] sm:$0xff]
    %v371 = vld [vmem:[#allocation3 + $0x930] sm:$0xff]
    %v372 = vld [vmem:[#allocation3 + $0x938] sm:$0xff]
    %v373 = vld [vmem:[#allocation3 + $0x940] sm:$0xff]
    %v374 = vld [vmem:[#allocation3 + $0x948] sm:$0xff]
    %v375 = vld [vmem:[#allocation3 + $0x950] sm:$0xff]
    %v376 = vld [vmem:[#allocation3 + $0x958] sm:$0xff]
    %v377 = vld [vmem:[#allocation3 + $0x960] sm:$0xff]
    %v378 = vld [vmem:[#allocation3 + $0x968] sm:$0xff]
    %v379 = vld [vmem:[#allocation3 + $0x970] sm:$0xff]
    %v380 = vld [vmem:[#allocation3 + $0x978] sm:$0xff]
    %v381 = vld [vmem:[#allocation3 + $0x980] sm:$0xff]
    %v382 = vld [vmem:[#allocation3 + $0x988] sm:$0xff]
    %v383 = vld [vmem:[#allocation3 + $0x990] sm:$0xff]
    %v384 = vld [vmem:[#allocation3 + $0x998] sm:$0xff]
    %v385 = vld [vmem:[#allocation3 + $0x9a0] sm:$0xff]
    %v386 = vld [vmem:[#allocation3 + $0x9a8] sm:$0xff]
    %v387 = vld [vmem:[#allocation3 + $0x9b0] sm:$0xff]
    %v388 = vld [vmem:[#allocation3 + $0x9b8] sm:$0xff]
    %v389 = vld [vmem:[#allocation3 + $0x9c0] sm:$0xff]
    %v390 = vld [vmem:[#allocation3 + $0x9c8] sm:$0xff]
    %v391 = vld [vmem:[#allocation3 + $0x9d0] sm:$0xff]
    %v392 = vld [vmem:[#allocation3 + $0x9d8] sm:$0xff]
    %v393 = vld [vmem:[#allocation3 + $0x9e0] sm:$0xff]
    %v394 = vld [vmem:[#allocation3 + $0x9e8] sm:$0xff]
    %v395 = vld [vmem:[#allocation3 + $0x9f0] sm:$0xff]
    %v396 = vld [vmem:[#allocation3 + $0x9f8] sm:$0xff]
    %v398 = vperm.slane %v67, 0
    %v399 = vperm.slane %v67, 1
    %v400 = vperm.slane %v67, 2
    %v401 = vperm.slane %v67, 3
    %v411 = vunpack.c.l.b16 %v72
    %v412 = vunpack.c.h.b16 %v72
    %v413 = vunpack.c.l.b16 %v73
    %v414 = vunpack.c.h.b16 %v73
    %v415 = vunpack.c.l.b16 %v74
    %v416 = vunpack.c.h.b16 %v74
    %v417 = vunpack.c.l.b16 %v75
    %v418 = vunpack.c.h.b16 %v75
    %v419 = vunpack.c.l.b16 %v76
    %v420 = vunpack.c.h.b16 %v76
    %v421 = vpack.c.b16 %v411, %v411
    %v422 = vpack.c.b16 %v412, %v412
    %v423 = vpack.c.b16 %v413, %v413
    %v424 = vpack.c.b16 %v414, %v414
    %v425 = vpack.c.b16 %v415, %v415
    %v426 = vpack.c.b16 %v416, %v416
    %v427 = vpack.c.b16 %v417, %v417
    %v428 = vpack.c.b16 %v418, %v418
    %v429 = vpack.c.b16 %v419, %v419
    %v430 = vpack.c.b16 %v420, %v420
    %v761 = vunpack.c.l.b16 %v77
    %v762 = vunpack.c.h.b16 %v77
    %v763 = vunpack.c.l.b16 %v78
    %v764 = vunpack.c.h.b16 %v78
    %v765 = vunpack.c.l.b16 %v79
    %v766 = vunpack.c.h.b16 %v79
    %v767 = vunpack.c.l.b16 %v80
    %v768 = vunpack.c.h.b16 %v80
    %v769 = vunpack.c.l.b16 %v81
    %v770 = vunpack.c.h.b16 %v81
    %v771 = vunpack.c.l.b16 %v82
    %v772 = vunpack.c.h.b16 %v82
    %v773 = vunpack.c.l.b16 %v83
    %v774 = vunpack.c.h.b16 %v83
    %v775 = vunpack.c.l.b16 %v84
    %v776 = vunpack.c.h.b16 %v84
    %v777 = vunpack.c.l.b16 %v85
    %v778 = vunpack.c.h.b16 %v85
    %v779 = vunpack.c.l.b16 %v86
    %v780 = vunpack.c.h.b16 %v86
    %v781 = vunpack.c.l.b16 %v87
    %v782 = vunpack.c.h.b16 %v87
    %v783 = vunpack.c.l.b16 %v88
    %v784 = vunpack.c.h.b16 %v88
    %v785 = vunpack.c.l.b16 %v89
    %v786 = vunpack.c.h.b16 %v89
    %v787 = vunpack.c.l.b16 %v90
    %v788 = vunpack.c.h.b16 %v90
    %v789 = vunpack.c.l.b16 %v91
    %v790 = vunpack.c.h.b16 %v91
    %v791 = vunpack.c.l.b16 %v92
    %v792 = vunpack.c.h.b16 %v92
    %v793 = vunpack.c.l.b16 %v93
    %v794 = vunpack.c.h.b16 %v93
    %v795 = vunpack.c.l.b16 %v94
    %v796 = vunpack.c.h.b16 %v94
    %v797 = vunpack.c.l.b16 %v95
    %v798 = vunpack.c.h.b16 %v95
    %v799 = vunpack.c.l.b16 %v96
    %v800 = vunpack.c.h.b16 %v96
    %v801 = vunpack.c.l.b16 %v97
    %v802 = vunpack.c.h.b16 %v97
    %v803 = vunpack.c.l.b16 %v98
    %v804 = vunpack.c.h.b16 %v98
    %v805 = vunpack.c.l.b16 %v99
    %v806 = vunpack.c.h.b16 %v99
    %v807 = vunpack.c.l.b16 %v100
    %v808 = vunpack.c.h.b16 %v100
    %v809 = vunpack.c.l.b16 %v101
    %v810 = vunpack.c.h.b16 %v101
    %v811 = vunpack.c.l.b16 %v102
    %v812 = vunpack.c.h.b16 %v102
    %v813 = vunpack.c.l.b16 %v103
    %v814 = vunpack.c.h.b16 %v103
    %v815 = vunpack.c.l.b16 %v104
    %v816 = vunpack.c.h.b16 %v104
    %v817 = vunpack.c.l.b16 %v105
    %v818 = vunpack.c.h.b16 %v105
    %v819 = vunpack.c.l.b16 %v106
    %v820 = vunpack.c.h.b16 %v106
    %v821 = vunpack.c.l.b16 %v107
    %v822 = vunpack.c.h.b16 %v107
    %v823 = vunpack.c.l.b16 %v108
    %v824 = vunpack.c.h.b16 %v108
    %v825 = vunpack.c.l.b16 %v109
    %v826 = vunpack.c.h.b16 %v109
    %v827 = vunpack.c.l.b16 %v110
    %v828 = vunpack.c.h.b16 %v110
    %v829 = vunpack.c.l.b16 %v111
    %v830 = vunpack.c.h.b16 %v111
    %v831 = vunpack.c.l.b16 %v112
    %v832 = vunpack.c.h.b16 %v112
    %v833 = vunpack.c.l.b16 %v113
    %v834 = vunpack.c.h.b16 %v113
    %v835 = vunpack.c.l.b16 %v114
    %v836 = vunpack.c.h.b16 %v114
    %v837 = vunpack.c.l.b16 %v115
    %v838 = vunpack.c.h.b16 %v115
    %v839 = vunpack.c.l.b16 %v116
    %v840 = vunpack.c.h.b16 %v116
    %v841 = vunpack.c.l.b16 %v117
    %v842 = vunpack.c.h.b16 %v117
    %v843 = vunpack.c.l.b16 %v118
    %v844 = vunpack.c.h.b16 %v118
    %v845 = vunpack.c.l.b16 %v119
    %v846 = vunpack.c.h.b16 %v119
    %v847 = vunpack.c.l.b16 %v120
    %v848 = vunpack.c.h.b16 %v120
    %v849 = vunpack.c.l.b16 %v121
    %v850 = vunpack.c.h.b16 %v121
    %v851 = vunpack.c.l.b16 %v122
    %v852 = vunpack.c.h.b16 %v122
    %v853 = vunpack.c.l.b16 %v123
    %v854 = vunpack.c.h.b16 %v123
    %v855 = vunpack.c.l.b16 %v124
    %v856 = vunpack.c.h.b16 %v124
    %v857 = vunpack.c.l.b16 %v125
    %v858 = vunpack.c.h.b16 %v125
    %v859 = vunpack.c.l.b16 %v126
    %v860 = vunpack.c.h.b16 %v126
    %v861 = vunpack.c.l.b16 %v127
    %v862 = vunpack.c.h.b16 %v127
    %v863 = vunpack.c.l.b16 %v128
    %v864 = vunpack.c.h.b16 %v128
    %v865 = vunpack.c.l.b16 %v129
    %v866 = vunpack.c.h.b16 %v129
    %v867 = vunpack.c.l.b16 %v130
    %v868 = vunpack.c.h.b16 %v130
    %v869 = vunpack.c.l.b16 %v131
    %v870 = vunpack.c.h.b16 %v131
    %v871 = vunpack.c.l.b16 %v132
    %v872 = vunpack.c.h.b16 %v132
    %v873 = vunpack.c.l.b16 %v133
    %v874 = vunpack.c.h.b16 %v133
    %v875 = vunpack.c.l.b16 %v134
    %v876 = vunpack.c.h.b16 %v134
    %v877 = vunpack.c.l.b16 %v135
    %v878 = vunpack.c.h.b16 %v135
    %v879 = vunpack.c.l.b16 %v136
    %v880 = vunpack.c.h.b16 %v136
    %v881 = vunpack.c.l.b16 %v137
    %v882 = vunpack.c.h.b16 %v137
    %v883 = vunpack.c.l.b16 %v138
    %v884 = vunpack.c.h.b16 %v138
    %v885 = vunpack.c.l.b16 %v139
    %v886 = vunpack.c.h.b16 %v139
    %v887 = vunpack.c.l.b16 %v140
    %v888 = vunpack.c.h.b16 %v140
    %v889 = vunpack.c.l.b16 %v141
    %v890 = vunpack.c.h.b16 %v141
    %v891 = vunpack.c.l.b16 %v142
    %v892 = vunpack.c.h.b16 %v142
    %v893 = vunpack.c.l.b16 %v143
    %v894 = vunpack.c.h.b16 %v143
    %v895 = vunpack.c.l.b16 %v144
    %v896 = vunpack.c.h.b16 %v144
    %v897 = vunpack.c.l.b16 %v145
    %v898 = vunpack.c.h.b16 %v145
    %v899 = vunpack.c.l.b16 %v146
    %v900 = vunpack.c.h.b16 %v146
    %v901 = vunpack.c.l.b16 %v147
    %v902 = vunpack.c.h.b16 %v147
    %v903 = vunpack.c.l.b16 %v148
    %v904 = vunpack.c.h.b16 %v148
    %v905 = vunpack.c.l.b16 %v149
    %v906 = vunpack.c.h.b16 %v149
    %v907 = vunpack.c.l.b16 %v150
    %v908 = vunpack.c.h.b16 %v150
    %v909 = vunpack.c.l.b16 %v151
    %v910 = vunpack.c.h.b16 %v151
    %v911 = vunpack.c.l.b16 %v152
    %v912 = vunpack.c.h.b16 %v152
    %v913 = vunpack.c.l.b16 %v153
    %v914 = vunpack.c.h.b16 %v153
    %v915 = vunpack.c.l.b16 %v154
    %v916 = vunpack.c.h.b16 %v154
    %v917 = vunpack.c.l.b16 %v155
    %v918 = vunpack.c.h.b16 %v155
    %v919 = vunpack.c.l.b16 %v156
    %v920 = vunpack.c.h.b16 %v156
    %v921 = vunpack.c.l.b16 %v157
    %v922 = vunpack.c.h.b16 %v157
    %v923 = vunpack.c.l.b16 %v158
    %v924 = vunpack.c.h.b16 %v158
    %v925 = vunpack.c.l.b16 %v159
    %v926 = vunpack.c.h.b16 %v159
    %v927 = vunpack.c.l.b16 %v160
    %v928 = vunpack.c.h.b16 %v160
    %v929 = vunpack.c.l.b16 %v161
    %v930 = vunpack.c.h.b16 %v161
    %v931 = vunpack.c.l.b16 %v162
    %v932 = vunpack.c.h.b16 %v162
    %v933 = vunpack.c.l.b16 %v163
    %v934 = vunpack.c.h.b16 %v163
    %v935 = vunpack.c.l.b16 %v164
    %v936 = vunpack.c.h.b16 %v164
    %v937 = vunpack.c.l.b16 %v165
    %v938 = vunpack.c.h.b16 %v165
    %v939 = vunpack.c.l.b16 %v166
    %v940 = vunpack.c.h.b16 %v166
    %v941 = vunpack.c.l.b16 %v167
    %v942 = vunpack.c.h.b16 %v167
    %v943 = vunpack.c.l.b16 %v168
    %v944 = vunpack.c.h.b16 %v168
    %v945 = vunpack.c.l.b16 %v169
    %v946 = vunpack.c.h.b16 %v169
    %v947 = vunpack.c.l.b16 %v170
    %v948 = vunpack.c.h.b16 %v170
    %v949 = vunpack.c.l.b16 %v171
    %v950 = vunpack.c.h.b16 %v171
    %v951 = vunpack.c.l.b16 %v172
    %v952 = vunpack.c.h.b16 %v172
    %v953 = vunpack.c.l.b16 %v173
    %v954 = vunpack.c.h.b16 %v173
    %v955 = vunpack.c.l.b16 %v174
    %v956 = vunpack.c.h.b16 %v174
    %v957 = vunpack.c.l.b16 %v175
    %v958 = vunpack.c.h.b16 %v175
    %v959 = vunpack.c.l.b16 %v176
    %v960 = vunpack.c.h.b16 %v176
    %v961 = vunpack.c.l.b16 %v177
    %v962 = vunpack.c.h.b16 %v177
    %v963 = vunpack.c.l.b16 %v178
    %v964 = vunpack.c.h.b16 %v178
    %v965 = vunpack.c.l.b16 %v179
    %v966 = vunpack.c.h.b16 %v179
    %v967 = vunpack.c.l.b16 %v180
    %v968 = vunpack.c.h.b16 %v180
    %v969 = vunpack.c.l.b16 %v181
    %v970 = vunpack.c.h.b16 %v181
    %v971 = vunpack.c.l.b16 %v182
    %v972 = vunpack.c.h.b16 %v182
    %v973 = vunpack.c.l.b16 %v183
    %v974 = vunpack.c.h.b16 %v183
    %v975 = vunpack.c.l.b16 %v184
    %v976 = vunpack.c.h.b16 %v184
    %v977 = vunpack.c.l.b16 %v185
    %v978 = vunpack.c.h.b16 %v185
    %v979 = vunpack.c.l.b16 %v186
    %v980 = vunpack.c.h.b16 %v186
    %v981 = vunpack.c.l.b16 %v187
    %v982 = vunpack.c.h.b16 %v187
    %v983 = vunpack.c.l.b16 %v188
    %v984 = vunpack.c.h.b16 %v188
    %v985 = vunpack.c.l.b16 %v189
    %v986 = vunpack.c.h.b16 %v189
    %v987 = vunpack.c.l.b16 %v190
    %v988 = vunpack.c.h.b16 %v190
    %v989 = vunpack.c.l.b16 %v191
    %v990 = vunpack.c.h.b16 %v191
    %v991 = vunpack.c.l.b16 %v192
    %v992 = vunpack.c.h.b16 %v192
    %v993 = vunpack.c.l.b16 %v193
    %v994 = vunpack.c.h.b16 %v193
    %v995 = vunpack.c.l.b16 %v194
    %v996 = vunpack.c.h.b16 %v194
    %v997 = vunpack.c.l.b16 %v195
    %v998 = vunpack.c.h.b16 %v195
    %v999 = vunpack.c.l.b16 %v196
    %v1000 = vunpack.c.h.b16 %v196
    %v1001 = vunpack.c.l.b16 %v197
    %v1002 = vunpack.c.h.b16 %v197
    %v1003 = vunpack.c.l.b16 %v198
    %v1004 = vunpack.c.h.b16 %v198
    %v1005 = vunpack.c.l.b16 %v199
    %v1006 = vunpack.c.h.b16 %v199
    %v1007 = vunpack.c.l.b16 %v200
    %v1008 = vunpack.c.h.b16 %v200
    %v1009 = vunpack.c.l.b16 %v201
    %v1010 = vunpack.c.h.b16 %v201
    %v1011 = vunpack.c.l.b16 %v202
    %v1012 = vunpack.c.h.b16 %v202
    %v1013 = vunpack.c.l.b16 %v203
    %v1014 = vunpack.c.h.b16 %v203
    %v1015 = vunpack.c.l.b16 %v204
    %v1016 = vunpack.c.h.b16 %v204
    %v1017 = vunpack.c.l.b16 %v205
    %v1018 = vunpack.c.h.b16 %v205
    %v1019 = vunpack.c.l.b16 %v206
    %v1020 = vunpack.c.h.b16 %v206
    %v1021 = vunpack.c.l.b16 %v207
    %v1022 = vunpack.c.h.b16 %v207
    %v1023 = vunpack.c.l.b16 %v208
    %v1024 = vunpack.c.h.b16 %v208
    %v1025 = vunpack.c.l.b16 %v209
    %v1026 = vunpack.c.h.b16 %v209
    %v1027 = vunpack.c.l.b16 %v210
    %v1028 = vunpack.c.h.b16 %v210
    %v1029 = vunpack.c.l.b16 %v211
    %v1030 = vunpack.c.h.b16 %v211
    %v1031 = vunpack.c.l.b16 %v212
    %v1032 = vunpack.c.h.b16 %v212
    %v1033 = vunpack.c.l.b16 %v213
    %v1034 = vunpack.c.h.b16 %v213
    %v1035 = vunpack.c.l.b16 %v214
    %v1036 = vunpack.c.h.b16 %v214
    %v1037 = vunpack.c.l.b16 %v215
    %v1038 = vunpack.c.h.b16 %v215
    %v1039 = vunpack.c.l.b16 %v216
    %v1040 = vunpack.c.h.b16 %v216
    %v1041 = vunpack.c.l.b16 %v217
    %v1042 = vunpack.c.h.b16 %v217
    %v1043 = vunpack.c.l.b16 %v218
    %v1044 = vunpack.c.h.b16 %v218
    %v1045 = vunpack.c.l.b16 %v219
    %v1046 = vunpack.c.h.b16 %v219
    %v1047 = vunpack.c.l.b16 %v220
    %v1048 = vunpack.c.h.b16 %v220
    %v1049 = vunpack.c.l.b16 %v221
    %v1050 = vunpack.c.h.b16 %v221
    %v1051 = vunpack.c.l.b16 %v222
    %v1052 = vunpack.c.h.b16 %v222
    %v1053 = vunpack.c.l.b16 %v223
    %v1054 = vunpack.c.h.b16 %v223
    %v1055 = vunpack.c.l.b16 %v224
    %v1056 = vunpack.c.h.b16 %v224
    %v1057 = vunpack.c.l.b16 %v225
    %v1058 = vunpack.c.h.b16 %v225
    %v1059 = vunpack.c.l.b16 %v226
    %v1060 = vunpack.c.h.b16 %v226
    %v1061 = vunpack.c.l.b16 %v227
    %v1062 = vunpack.c.h.b16 %v227
    %v1063 = vunpack.c.l.b16 %v228
    %v1064 = vunpack.c.h.b16 %v228
    %v1065 = vunpack.c.l.b16 %v229
    %v1066 = vunpack.c.h.b16 %v229
    %v1067 = vunpack.c.l.b16 %v230
    %v1068 = vunpack.c.h.b16 %v230
    %v1069 = vunpack.c.l.b16 %v231
    %v1070 = vunpack.c.h.b16 %v231
    %v1071 = vunpack.c.l.b16 %v232
    %v1072 = vunpack.c.h.b16 %v232
    %v1073 = vunpack.c.l.b16 %v233
    %v1074 = vunpack.c.h.b16 %v233
    %v1075 = vunpack.c.l.b16 %v234
    %v1076 = vunpack.c.h.b16 %v234
    %v1077 = vunpack.c.l.b16 %v235
    %v1078 = vunpack.c.h.b16 %v235
    %v1079 = vunpack.c.l.b16 %v236
    %v1080 = vunpack.c.h.b16 %v236
    %v1081 = vunpack.c.l.b16 %v237
    %v1082 = vunpack.c.h.b16 %v237
    %v1083 = vunpack.c.l.b16 %v238
    %v1084 = vunpack.c.h.b16 %v238
    %v1085 = vunpack.c.l.b16 %v239
    %v1086 = vunpack.c.h.b16 %v239
    %v1087 = vunpack.c.l.b16 %v240
    %v1088 = vunpack.c.h.b16 %v240
    %v1089 = vunpack.c.l.b16 %v241
    %v1090 = vunpack.c.h.b16 %v241
    %v1091 = vunpack.c.l.b16 %v242
    %v1092 = vunpack.c.h.b16 %v242
    %v1093 = vunpack.c.l.b16 %v243
    %v1094 = vunpack.c.h.b16 %v243
    %v1095 = vunpack.c.l.b16 %v244
    %v1096 = vunpack.c.h.b16 %v244
    %v1097 = vunpack.c.l.b16 %v245
    %v1098 = vunpack.c.h.b16 %v245
    %v1099 = vunpack.c.l.b16 %v246
    %v1100 = vunpack.c.h.b16 %v246
    %v1101 = vunpack.c.l.b16 %v247
    %v1102 = vunpack.c.h.b16 %v247
    %v1103 = vunpack.c.l.b16 %v248
    %v1104 = vunpack.c.h.b16 %v248
    %v1105 = vunpack.c.l.b16 %v249
    %v1106 = vunpack.c.h.b16 %v249
    %v1107 = vunpack.c.l.b16 %v250
    %v1108 = vunpack.c.h.b16 %v250
    %v1109 = vunpack.c.l.b16 %v251
    %v1110 = vunpack.c.h.b16 %v251
    %v1111 = vunpack.c.l.b16 %v252
    %v1112 = vunpack.c.h.b16 %v252
    %v1113 = vunpack.c.l.b16 %v253
    %v1114 = vunpack.c.h.b16 %v253
    %v1115 = vunpack.c.l.b16 %v254
    %v1116 = vunpack.c.h.b16 %v254
    %v1117 = vunpack.c.l.b16 %v255
    %v1118 = vunpack.c.h.b16 %v255
    %v1119 = vunpack.c.l.b16 %v256
    %v1120 = vunpack.c.h.b16 %v256
    %v1121 = vunpack.c.l.b16 %v257
    %v1122 = vunpack.c.h.b16 %v257
    %v1123 = vunpack.c.l.b16 %v258
    %v1124 = vunpack.c.h.b16 %v258
    %v1125 = vunpack.c.l.b16 %v259
    %v1126 = vunpack.c.h.b16 %v259
    %v1127 = vunpack.c.l.b16 %v260
    %v1128 = vunpack.c.h.b16 %v260
    %v1129 = vunpack.c.l.b16 %v261
    %v1130 = vunpack.c.h.b16 %v261
    %v1131 = vunpack.c.l.b16 %v262
    %v1132 = vunpack.c.h.b16 %v262
    %v1133 = vunpack.c.l.b16 %v263
    %v1134 = vunpack.c.h.b16 %v263
    %v1135 = vunpack.c.l.b16 %v264
    %v1136 = vunpack.c.h.b16 %v264
    %v1137 = vunpack.c.l.b16 %v265
    %v1138 = vunpack.c.h.b16 %v265
    %v1139 = vunpack.c.l.b16 %v266
    %v1140 = vunpack.c.h.b16 %v266
    %v1141 = vunpack.c.l.b16 %v267
    %v1142 = vunpack.c.h.b16 %v267
    %v1143 = vunpack.c.l.b16 %v268
    %v1144 = vunpack.c.h.b16 %v268
    %v1145 = vunpack.c.l.b16 %v269
    %v1146 = vunpack.c.h.b16 %v269
    %v1147 = vunpack.c.l.b16 %v270
    %v1148 = vunpack.c.h.b16 %v270
    %v1149 = vunpack.c.l.b16 %v271
    %v1150 = vunpack.c.h.b16 %v271
    %v1151 = vunpack.c.l.b16 %v272
    %v1152 = vunpack.c.h.b16 %v272
    %v1153 = vunpack.c.l.b16 %v273
    %v1154 = vunpack.c.h.b16 %v273
    %v1155 = vunpack.c.l.b16 %v274
    %v1156 = vunpack.c.h.b16 %v274
    %v1157 = vunpack.c.l.b16 %v275
    %v1158 = vunpack.c.h.b16 %v275
    %v1159 = vunpack.c.l.b16 %v276
    %v1160 = vunpack.c.h.b16 %v276
    %v1161 = vunpack.c.l.b16 %v277
    %v1162 = vunpack.c.h.b16 %v277
    %v1163 = vunpack.c.l.b16 %v278
    %v1164 = vunpack.c.h.b16 %v278
    %v1165 = vunpack.c.l.b16 %v279
    %v1166 = vunpack.c.h.b16 %v279
    %v1167 = vunpack.c.l.b16 %v280
    %v1168 = vunpack.c.h.b16 %v280
    %v1169 = vunpack.c.l.b16 %v281
    %v1170 = vunpack.c.h.b16 %v281
    %v1171 = vunpack.c.l.b16 %v282
    %v1172 = vunpack.c.h.b16 %v282
    %v1173 = vunpack.c.l.b16 %v283
    %v1174 = vunpack.c.h.b16 %v283
    %v1175 = vunpack.c.l.b16 %v284
    %v1176 = vunpack.c.h.b16 %v284
    %v1177 = vunpack.c.l.b16 %v285
    %v1178 = vunpack.c.h.b16 %v285
    %v1179 = vunpack.c.l.b16 %v286
    %v1180 = vunpack.c.h.b16 %v286
    %v1181 = vunpack.c.l.b16 %v287
    %v1182 = vunpack.c.h.b16 %v287
    %v1183 = vunpack.c.l.b16 %v288
    %v1184 = vunpack.c.h.b16 %v288
    %v1185 = vunpack.c.l.b16 %v289
    %v1186 = vunpack.c.h.b16 %v289
    %v1187 = vunpack.c.l.b16 %v290
    %v1188 = vunpack.c.h.b16 %v290
    %v1189 = vunpack.c.l.b16 %v291
    %v1190 = vunpack.c.h.b16 %v291
    %v1191 = vunpack.c.l.b16 %v292
    %v1192 = vunpack.c.h.b16 %v292
    %v1193 = vunpack.c.l.b16 %v293
    %v1194 = vunpack.c.h.b16 %v293
    %v1195 = vunpack.c.l.b16 %v294
    %v1196 = vunpack.c.h.b16 %v294
    %v1197 = vunpack.c.l.b16 %v295
    %v1198 = vunpack.c.h.b16 %v295
    %v1199 = vunpack.c.l.b16 %v296
    %v1200 = vunpack.c.h.b16 %v296
    %v1201 = vunpack.c.l.b16 %v297
    %v1202 = vunpack.c.h.b16 %v297
    %v1203 = vunpack.c.l.b16 %v298
    %v1204 = vunpack.c.h.b16 %v298
    %v1205 = vunpack.c.l.b16 %v299
    %v1206 = vunpack.c.h.b16 %v299
    %v1207 = vunpack.c.l.b16 %v300
    %v1208 = vunpack.c.h.b16 %v300
    %v1209 = vunpack.c.l.b16 %v301
    %v1210 = vunpack.c.h.b16 %v301
    %v1211 = vunpack.c.l.b16 %v302
    %v1212 = vunpack.c.h.b16 %v302
    %v1213 = vunpack.c.l.b16 %v303
    %v1214 = vunpack.c.h.b16 %v303
    %v1215 = vunpack.c.l.b16 %v304
    %v1216 = vunpack.c.h.b16 %v304
    %v1217 = vunpack.c.l.b16 %v305
    %v1218 = vunpack.c.h.b16 %v305
    %v1219 = vunpack.c.l.b16 %v306
    %v1220 = vunpack.c.h.b16 %v306
    %v1221 = vunpack.c.l.b16 %v307
    %v1222 = vunpack.c.h.b16 %v307
    %v1223 = vunpack.c.l.b16 %v308
    %v1224 = vunpack.c.h.b16 %v308
    %v1225 = vunpack.c.l.b16 %v309
    %v1226 = vunpack.c.h.b16 %v309
    %v1227 = vunpack.c.l.b16 %v310
    %v1228 = vunpack.c.h.b16 %v310
    %v1229 = vunpack.c.l.b16 %v311
    %v1230 = vunpack.c.h.b16 %v311
    %v1231 = vunpack.c.l.b16 %v312
    %v1232 = vunpack.c.h.b16 %v312
    %v1233 = vunpack.c.l.b16 %v313
    %v1234 = vunpack.c.h.b16 %v313
    %v1235 = vunpack.c.l.b16 %v314
    %v1236 = vunpack.c.h.b16 %v314
    %v1237 = vunpack.c.l.b16 %v315
    %v1238 = vunpack.c.h.b16 %v315
    %v1239 = vunpack.c.l.b16 %v316
    %v1240 = vunpack.c.h.b16 %v316
    %v1241 = vunpack.c.l.b16 %v317
    %v1242 = vunpack.c.h.b16 %v317
    %v1243 = vunpack.c.l.b16 %v318
    %v1244 = vunpack.c.h.b16 %v318
    %v1245 = vunpack.c.l.b16 %v319
    %v1246 = vunpack.c.h.b16 %v319
    %v1247 = vunpack.c.l.b16 %v320
    %v1248 = vunpack.c.h.b16 %v320
    %v1249 = vunpack.c.l.b16 %v321
    %v1250 = vunpack.c.h.b16 %v321
    %v1251 = vunpack.c.l.b16 %v322
    %v1252 = vunpack.c.h.b16 %v322
    %v1253 = vunpack.c.l.b16 %v323
    %v1254 = vunpack.c.h.b16 %v323
    %v1255 = vunpack.c.l.b16 %v324
    %v1256 = vunpack.c.h.b16 %v324
    %v1257 = vunpack.c.l.b16 %v325
    %v1258 = vunpack.c.h.b16 %v325
    %v1259 = vunpack.c.l.b16 %v326
    %v1260 = vunpack.c.h.b16 %v326
    %v1261 = vunpack.c.l.b16 %v327
    %v1262 = vunpack.c.h.b16 %v327
    %v1263 = vunpack.c.l.b16 %v328
    %v1264 = vunpack.c.h.b16 %v328
    %v1265 = vunpack.c.l.b16 %v329
    %v1266 = vunpack.c.h.b16 %v329
    %v1267 = vunpack.c.l.b16 %v330
    %v1268 = vunpack.c.h.b16 %v330
    %v1269 = vunpack.c.l.b16 %v331
    %v1270 = vunpack.c.h.b16 %v331
    %v1271 = vunpack.c.l.b16 %v332
    %v1272 = vunpack.c.h.b16 %v332
    %v1273 = vunpack.c.l.b16 %v333
    %v1274 = vunpack.c.h.b16 %v333
    %v1275 = vunpack.c.l.b16 %v334
    %v1276 = vunpack.c.h.b16 %v334
    %v1277 = vunpack.c.l.b16 %v335
    %v1278 = vunpack.c.h.b16 %v335
    %v1279 = vunpack.c.l.b16 %v336
    %v1280 = vunpack.c.h.b16 %v336
    %v1281 = vunpack.c.l.b16 %v337
    %v1282 = vunpack.c.h.b16 %v337
    %v1283 = vunpack.c.l.b16 %v338
    %v1284 = vunpack.c.h.b16 %v338
    %v1285 = vunpack.c.l.b16 %v339
    %v1286 = vunpack.c.h.b16 %v339
    %v1287 = vunpack.c.l.b16 %v340
    %v1288 = vunpack.c.h.b16 %v340
    %v1289 = vunpack.c.l.b16 %v341
    %v1290 = vunpack.c.h.b16 %v341
    %v1291 = vunpack.c.l.b16 %v342
    %v1292 = vunpack.c.h.b16 %v342
    %v1293 = vunpack.c.l.b16 %v343
    %v1294 = vunpack.c.h.b16 %v343
    %v1295 = vunpack.c.l.b16 %v344
    %v1296 = vunpack.c.h.b16 %v344
    %v1297 = vunpack.c.l.b16 %v345
    %v1298 = vunpack.c.h.b16 %v345
    %v1299 = vunpack.c.l.b16 %v346
    %v1300 = vunpack.c.h.b16 %v346
    %v1301 = vunpack.c.l.b16 %v347
    %v1302 = vunpack.c.h.b16 %v347
    %v1303 = vunpack.c.l.b16 %v348
    %v1304 = vunpack.c.h.b16 %v348
    %v1305 = vunpack.c.l.b16 %v349
    %v1306 = vunpack.c.h.b16 %v349
    %v1307 = vunpack.c.l.b16 %v350
    %v1308 = vunpack.c.h.b16 %v350
    %v1309 = vunpack.c.l.b16 %v351
    %v1310 = vunpack.c.h.b16 %v351
    %v1311 = vunpack.c.l.b16 %v352
    %v1312 = vunpack.c.h.b16 %v352
    %v1313 = vunpack.c.l.b16 %v353
    %v1314 = vunpack.c.h.b16 %v353
    %v1315 = vunpack.c.l.b16 %v354
    %v1316 = vunpack.c.h.b16 %v354
    %v1317 = vunpack.c.l.b16 %v355
    %v1318 = vunpack.c.h.b16 %v355
    %v1319 = vunpack.c.l.b16 %v356
    %v1320 = vunpack.c.h.b16 %v356
    %v1321 = vunpack.c.l.b16 %v357
    %v1322 = vunpack.c.h.b16 %v357
    %v1323 = vunpack.c.l.b16 %v358
    %v1324 = vunpack.c.h.b16 %v358
    %v1325 = vunpack.c.l.b16 %v359
    %v1326 = vunpack.c.h.b16 %v359
    %v1327 = vunpack.c.l.b16 %v360
    %v1328 = vunpack.c.h.b16 %v360
    %v1329 = vunpack.c.l.b16 %v361
    %v1330 = vunpack.c.h.b16 %v361
    %v1331 = vunpack.c.l.b16 %v362
    %v1332 = vunpack.c.h.b16 %v362
    %v1333 = vunpack.c.l.b16 %v363
    %v1334 = vunpack.c.h.b16 %v363
    %v1335 = vunpack.c.l.b16 %v364
    %v1336 = vunpack.c.h.b16 %v364
    %v1337 = vunpack.c.l.b16 %v365
    %v1338 = vunpack.c.h.b16 %v365
    %v1339 = vunpack.c.l.b16 %v366
    %v1340 = vunpack.c.h.b16 %v366
    %v1341 = vunpack.c.l.b16 %v367
    %v1342 = vunpack.c.h.b16 %v367
    %v1343 = vunpack.c.l.b16 %v368
    %v1344 = vunpack.c.h.b16 %v368
    %v1345 = vunpack.c.l.b16 %v369
    %v1346 = vunpack.c.h.b16 %v369
    %v1347 = vunpack.c.l.b16 %v370
    %v1348 = vunpack.c.h.b16 %v370
    %v1349 = vunpack.c.l.b16 %v371
    %v1350 = vunpack.c.h.b16 %v371
    %v1351 = vunpack.c.l.b16 %v372
    %v1352 = vunpack.c.h.b16 %v372
    %v1353 = vunpack.c.l.b16 %v373
    %v1354 = vunpack.c.h.b16 %v373
    %v1355 = vunpack.c.l.b16 %v374
    %v1356 = vunpack.c.h.b16 %v374
    %v1357 = vunpack.c.l.b16 %v375
    %v1358 = vunpack.c.h.b16 %v375
    %v1359 = vunpack.c.l.b16 %v376
    %v1360 = vunpack.c.h.b16 %v376
    %v1361 = vunpack.c.l.b16 %v377
    %v1362 = vunpack.c.h.b16 %v377
    %v1363 = vunpack.c.l.b16 %v378
    %v1364 = vunpack.c.h.b16 %v378
    %v1365 = vunpack.c.l.b16 %v379
    %v1366 = vunpack.c.h.b16 %v379
    %v1367 = vunpack.c.l.b16 %v380
    %v1368 = vunpack.c.h.b16 %v380
    %v1369 = vunpack.c.l.b16 %v381
    %v1370 = vunpack.c.h.b16 %v381
    %v1371 = vunpack.c.l.b16 %v382
    %v1372 = vunpack.c.h.b16 %v382
    %v1373 = vunpack.c.l.b16 %v383
    %v1374 = vunpack.c.h.b16 %v383
    %v1375 = vunpack.c.l.b16 %v384
    %v1376 = vunpack.c.h.b16 %v384
    %v1377 = vunpack.c.l.b16 %v385
    %v1378 = vunpack.c.h.b16 %v385
    %v1379 = vunpack.c.l.b16 %v386
    %v1380 = vunpack.c.h.b16 %v386
    %v1381 = vunpack.c.l.b16 %v387
    %v1382 = vunpack.c.h.b16 %v387
    %v1383 = vunpack.c.l.b16 %v388
    %v1384 = vunpack.c.h.b16 %v388
    %v1385 = vunpack.c.l.b16 %v389
    %v1386 = vunpack.c.h.b16 %v389
    %v1387 = vunpack.c.l.b16 %v390
    %v1388 = vunpack.c.h.b16 %v390
    %v1389 = vunpack.c.l.b16 %v391
    %v1390 = vunpack.c.h.b16 %v391
    %v1391 = vunpack.c.l.b16 %v392
    %v1392 = vunpack.c.h.b16 %v392
    %v1393 = vunpack.c.l.b16 %v393
    %v1394 = vunpack.c.h.b16 %v393
    %v1395 = vunpack.c.l.b16 %v394
    %v1396 = vunpack.c.h.b16 %v394
    %v1397 = vunpack.c.l.b16 %v395
    %v1398 = vunpack.c.h.b16 %v395
    %v1399 = vunpack.c.l.b16 %v396
    %v1400 = vunpack.c.h.b16 %v396
    %v1401 = vpack.c.b16 %v765, %v761
    %v1402 = vpack.c.b16 %v766, %v762
    %v1403 = vpack.c.b16 %v767, %v763
    %v1404 = vpack.c.b16 %v768, %v764
    %v1405 = vpack.c.b16 %v773, %v769
    %v1406 = vpack.c.b16 %v774, %v770
    %v1407 = vpack.c.b16 %v775, %v771
    %v1408 = vpack.c.b16 %v776, %v772
    %v1409 = vpack.c.b16 %v781, %v777
    %v1410 = vpack.c.b16 %v782, %v778
    %v1411 = vpack.c.b16 %v783, %v779
    %v1412 = vpack.c.b16 %v784, %v780
    %v1413 = vpack.c.b16 %v789, %v785
    %v1414 = vpack.c.b16 %v790, %v786
    %v1415 = vpack.c.b16 %v791, %v787
    %v1416 = vpack.c.b16 %v792, %v788
    %v1417 = vpack.c.b16 %v797, %v793
    %v1418 = vpack.c.b16 %v798, %v794
    %v1419 = vpack.c.b16 %v799, %v795
    %v1420 = vpack.c.b16 %v800, %v796
    %v1421 = vpack.c.b16 %v805, %v801
    %v1422 = vpack.c.b16 %v806, %v802
    %v1423 = vpack.c.b16 %v807, %v803
    %v1424 = vpack.c.b16 %v808, %v804
    %v1425 = vpack.c.b16 %v813, %v809
    %v1426 = vpack.c.b16 %v814, %v810
    %v1427 = vpack.c.b16 %v815, %v811
    %v1428 = vpack.c.b16 %v816, %v812
    %v1429 = vpack.c.b16 %v821, %v817
    %v1430 = vpack.c.b16 %v822, %v818
    %v1431 = vpack.c.b16 %v823, %v819
    %v1432 = vpack.c.b16 %v824, %v820
    %v1433 = vpack.c.b16 %v829, %v825
    %v1434 = vpack.c.b16 %v830, %v826
    %v1435 = vpack.c.b16 %v831, %v827
    %v1436 = vpack.c.b16 %v832, %v828
    %v1437 = vpack.c.b16 %v837, %v833
    %v1438 = vpack.c.b16 %v838, %v834
    %v1439 = vpack.c.b16 %v839, %v835
    %v1440 = vpack.c.b16 %v840, %v836
    %v1441 = vpack.c.b16 %v845, %v841
    %v1442 = vpack.c.b16 %v846, %v842
    %v1443 = vpack.c.b16 %v847, %v843
    %v1444 = vpack.c.b16 %v848, %v844
    %v1445 = vpack.c.b16 %v853, %v849
    %v1446 = vpack.c.b16 %v854, %v850
    %v1447 = vpack.c.b16 %v855, %v851
    %v1448 = vpack.c.b16 %v856, %v852
    %v1449 = vpack.c.b16 %v861, %v857
    %v1450 = vpack.c.b16 %v862, %v858
    %v1451 = vpack.c.b16 %v863, %v859
    %v1452 = vpack.c.b16 %v864, %v860
    %v1453 = vpack.c.b16 %v869, %v865
    %v1454 = vpack.c.b16 %v870, %v866
    %v1455 = vpack.c.b16 %v871, %v867
    %v1456 = vpack.c.b16 %v872, %v868
    %v1457 = vpack.c.b16 %v877, %v873
    %v1458 = vpack.c.b16 %v878, %v874
    %v1459 = vpack.c.b16 %v879, %v875
    %v1460 = vpack.c.b16 %v880, %v876
    %v1461 = vpack.c.b16 %v885, %v881
    %v1462 = vpack.c.b16 %v886, %v882
    %v1463 = vpack.c.b16 %v887, %v883
    %v1464 = vpack.c.b16 %v888, %v884
    %v1465 = vpack.c.b16 %v893, %v889
    %v1466 = vpack.c.b16 %v894, %v890
    %v1467 = vpack.c.b16 %v895, %v891
    %v1468 = vpack.c.b16 %v896, %v892
    %v1469 = vpack.c.b16 %v901, %v897
    %v1470 = vpack.c.b16 %v902, %v898
    %v1471 = vpack.c.b16 %v903, %v899
    %v1472 = vpack.c.b16 %v904, %v900
    %v1473 = vpack.c.b16 %v909, %v905
    %v1474 = vpack.c.b16 %v910, %v906
    %v1475 = vpack.c.b16 %v911, %v907
    %v1476 = vpack.c.b16 %v912, %v908
    %v1477 = vpack.c.b16 %v917, %v913
    %v1478 = vpack.c.b16 %v918, %v914
    %v1479 = vpack.c.b16 %v919, %v915
    %v1480 = vpack.c.b16 %v920, %v916
    %v1481 = vpack.c.b16 %v925, %v921
    %v1482 = vpack.c.b16 %v926, %v922
    %v1483 = vpack.c.b16 %v927, %v923
    %v1484 = vpack.c.b16 %v928, %v924
    %v1485 = vpack.c.b16 %v933, %v929
    %v1486 = vpack.c.b16 %v934, %v930
    %v1487 = vpack.c.b16 %v935, %v931
    %v1488 = vpack.c.b16 %v936, %v932
    %v1489 = vpack.c.b16 %v941, %v937
    %v1490 = vpack.c.b16 %v942, %v938
    %v1491 = vpack.c.b16 %v943, %v939
    %v1492 = vpack.c.b16 %v944, %v940
    %v1493 = vpack.c.b16 %v949, %v945
    %v1494 = vpack.c.b16 %v950, %v946
    %v1495 = vpack.c.b16 %v951, %v947
    %v1496 = vpack.c.b16 %v952, %v948
    %v1497 = vpack.c.b16 %v957, %v953
    %v1498 = vpack.c.b16 %v958, %v954
    %v1499 = vpack.c.b16 %v959, %v955
    %v1500 = vpack.c.b16 %v960, %v956
    %v1501 = vpack.c.b16 %v965, %v961
    %v1502 = vpack.c.b16 %v966, %v962
    %v1503 = vpack.c.b16 %v967, %v963
    %v1504 = vpack.c.b16 %v968, %v964
    %v1505 = vpack.c.b16 %v973, %v969
    %v1506 = vpack.c.b16 %v974, %v970
    %v1507 = vpack.c.b16 %v975, %v971
    %v1508 = vpack.c.b16 %v976, %v972
    %v1509 = vpack.c.b16 %v981, %v977
    %v1510 = vpack.c.b16 %v982, %v978
    %v1511 = vpack.c.b16 %v983, %v979
    %v1512 = vpack.c.b16 %v984, %v980
    %v1513 = vpack.c.b16 %v989, %v985
    %v1514 = vpack.c.b16 %v990, %v986
    %v1515 = vpack.c.b16 %v991, %v987
    %v1516 = vpack.c.b16 %v992, %v988
    %v1517 = vpack.c.b16 %v997, %v993
    %v1518 = vpack.c.b16 %v998, %v994
    %v1519 = vpack.c.b16 %v999, %v995
    %v1520 = vpack.c.b16 %v1000, %v996
    %v1521 = vpack.c.b16 %v1005, %v1001
    %v1522 = vpack.c.b16 %v1006, %v1002
    %v1523 = vpack.c.b16 %v1007, %v1003
    %v1524 = vpack.c.b16 %v1008, %v1004
    %v1525 = vpack.c.b16 %v1013, %v1009
    %v1526 = vpack.c.b16 %v1014, %v1010
    %v1527 = vpack.c.b16 %v1015, %v1011
    %v1528 = vpack.c.b16 %v1016, %v1012
    %v1529 = vpack.c.b16 %v1021, %v1017
    %v1530 = vpack.c.b16 %v1022, %v1018
    %v1531 = vpack.c.b16 %v1023, %v1019
    %v1532 = vpack.c.b16 %v1024, %v1020
    %v1533 = vpack.c.b16 %v1029, %v1025
    %v1534 = vpack.c.b16 %v1030, %v1026
    %v1535 = vpack.c.b16 %v1031, %v1027
    %v1536 = vpack.c.b16 %v1032, %v1028
    %v1537 = vpack.c.b16 %v1037, %v1033
    %v1538 = vpack.c.b16 %v1038, %v1034
    %v1539 = vpack.c.b16 %v1039, %v1035
    %v1540 = vpack.c.b16 %v1040, %v1036
    %v1541 = vpack.c.b16 %v1045, %v1041
    %v1542 = vpack.c.b16 %v1046, %v1042
    %v1543 = vpack.c.b16 %v1047, %v1043
    %v1544 = vpack.c.b16 %v1048, %v1044
    %v1545 = vpack.c.b16 %v1053, %v1049
    %v1546 = vpack.c.b16 %v1054, %v1050
    %v1547 = vpack.c.b16 %v1055, %v1051
    %v1548 = vpack.c.b16 %v1056, %v1052
    %v1549 = vpack.c.b16 %v1061, %v1057
    %v1550 = vpack.c.b16 %v1062, %v1058
    %v1551 = vpack.c.b16 %v1063, %v1059
    %v1552 = vpack.c.b16 %v1064, %v1060
    %v1553 = vpack.c.b16 %v1069, %v1065
    %v1554 = vpack.c.b16 %v1070, %v1066
    %v1555 = vpack.c.b16 %v1071, %v1067
    %v1556 = vpack.c.b16 %v1072, %v1068
    %v1557 = vpack.c.b16 %v1077, %v1073
    %v1558 = vpack.c.b16 %v1078, %v1074
    %v1559 = vpack.c.b16 %v1079, %v1075
    %v1560 = vpack.c.b16 %v1080, %v1076
    %v1561 = vpack.c.b16 %v1085, %v1081
    %v1562 = vpack.c.b16 %v1086, %v1082
    %v1563 = vpack.c.b16 %v1087, %v1083
    %v1564 = vpack.c.b16 %v1088, %v1084
    %v1565 = vpack.c.b16 %v1093, %v1089
    %v1566 = vpack.c.b16 %v1094, %v1090
    %v1567 = vpack.c.b16 %v1095, %v1091
    %v1568 = vpack.c.b16 %v1096, %v1092
    %v1569 = vpack.c.b16 %v1101, %v1097
    %v1570 = vpack.c.b16 %v1102, %v1098
    %v1571 = vpack.c.b16 %v1103, %v1099
    %v1572 = vpack.c.b16 %v1104, %v1100
    %v1573 = vpack.c.b16 %v1109, %v1105
    %v1574 = vpack.c.b16 %v1110, %v1106
    %v1575 = vpack.c.b16 %v1111, %v1107
    %v1576 = vpack.c.b16 %v1112, %v1108
    %v1577 = vpack.c.b16 %v1117, %v1113
    %v1578 = vpack.c.b16 %v1118, %v1114
    %v1579 = vpack.c.b16 %v1119, %v1115
    %v1580 = vpack.c.b16 %v1120, %v1116
    %v1581 = vpack.c.b16 %v1125, %v1121
    %v1582 = vpack.c.b16 %v1126, %v1122
    %v1583 = vpack.c.b16 %v1127, %v1123
    %v1584 = vpack.c.b16 %v1128, %v1124
    %v1585 = vpack.c.b16 %v1133, %v1129
    %v1586 = vpack.c.b16 %v1134, %v1130
    %v1587 = vpack.c.b16 %v1135, %v1131
    %v1588 = vpack.c.b16 %v1136, %v1132
    %v1589 = vpack.c.b16 %v1141, %v1137
    %v1590 = vpack.c.b16 %v1142, %v1138
    %v1591 = vpack.c.b16 %v1143, %v1139
    %v1592 = vpack.c.b16 %v1144, %v1140
    %v1593 = vpack.c.b16 %v1149, %v1145
    %v1594 = vpack.c.b16 %v1150, %v1146
    %v1595 = vpack.c.b16 %v1151, %v1147
    %v1596 = vpack.c.b16 %v1152, %v1148
    %v1597 = vpack.c.b16 %v1157, %v1153
    %v1598 = vpack.c.b16 %v1158, %v1154
    %v1599 = vpack.c.b16 %v1159, %v1155
    %v1600 = vpack.c.b16 %v1160, %v1156
    %v1601 = vpack.c.b16 %v1165, %v1161
    %v1602 = vpack.c.b16 %v1166, %v1162
    %v1603 = vpack.c.b16 %v1167, %v1163
    %v1604 = vpack.c.b16 %v1168, %v1164
    %v1605 = vpack.c.b16 %v1173, %v1169
    %v1606 = vpack.c.b16 %v1174, %v1170
    %v1607 = vpack.c.b16 %v1175, %v1171
    %v1608 = vpack.c.b16 %v1176, %v1172
    %v1609 = vpack.c.b16 %v1181, %v1177
    %v1610 = vpack.c.b16 %v1182, %v1178
    %v1611 = vpack.c.b16 %v1183, %v1179
    %v1612 = vpack.c.b16 %v1184, %v1180
    %v1613 = vpack.c.b16 %v1189, %v1185
    %v1614 = vpack.c.b16 %v1190, %v1186
    %v1615 = vpack.c.b16 %v1191, %v1187
    %v1616 = vpack.c.b16 %v1192, %v1188
    %v1617 = vpack.c.b16 %v1197, %v1193
    %v1618 = vpack.c.b16 %v1198, %v1194
    %v1619 = vpack.c.b16 %v1199, %v1195
    %v1620 = vpack.c.b16 %v1200, %v1196
    %v1621 = vpack.c.b16 %v1205, %v1201
    %v1622 = vpack.c.b16 %v1206, %v1202
    %v1623 = vpack.c.b16 %v1207, %v1203
    %v1624 = vpack.c.b16 %v1208, %v1204
    %v1625 = vpack.c.b16 %v1213, %v1209
    %v1626 = vpack.c.b16 %v1214, %v1210
    %v1627 = vpack.c.b16 %v1215, %v1211
    %v1628 = vpack.c.b16 %v1216, %v1212
    %v1629 = vpack.c.b16 %v1221, %v1217
    %v1630 = vpack.c.b16 %v1222, %v1218
    %v1631 = vpack.c.b16 %v1223, %v1219
    %v1632 = vpack.c.b16 %v1224, %v1220
    %v1633 = vpack.c.b16 %v1229, %v1225
    %v1634 = vpack.c.b16 %v1230, %v1226
    %v1635 = vpack.c.b16 %v1231, %v1227
    %v1636 = vpack.c.b16 %v1232, %v1228
    %v1637 = vpack.c.b16 %v1237, %v1233
    %v1638 = vpack.c.b16 %v1238, %v1234
    %v1639 = vpack.c.b16 %v1239, %v1235
    %v1640 = vpack.c.b16 %v1240, %v1236
    %v1641 = vpack.c.b16 %v1245, %v1241
    %v1642 = vpack.c.b16 %v1246, %v1242
    %v1643 = vpack.c.b16 %v1247, %v1243
    %v1644 = vpack.c.b16 %v1248, %v1244
    %v1645 = vpack.c.b16 %v1253, %v1249
    %v1646 = vpack.c.b16 %v1254, %v1250
    %v1647 = vpack.c.b16 %v1255, %v1251
    %v1648 = vpack.c.b16 %v1256, %v1252
    %v1649 = vpack.c.b16 %v1261, %v1257
    %v1650 = vpack.c.b16 %v1262, %v1258
    %v1651 = vpack.c.b16 %v1263, %v1259
    %v1652 = vpack.c.b16 %v1264, %v1260
    %v1653 = vpack.c.b16 %v1269, %v1265
    %v1654 = vpack.c.b16 %v1270, %v1266
    %v1655 = vpack.c.b16 %v1271, %v1267
    %v1656 = vpack.c.b16 %v1272, %v1268
    %v1657 = vpack.c.b16 %v1277, %v1273
    %v1658 = vpack.c.b16 %v1278, %v1274
    %v1659 = vpack.c.b16 %v1279, %v1275
    %v1660 = vpack.c.b16 %v1280, %v1276
    %v1661 = vpack.c.b16 %v1285, %v1281
    %v1662 = vpack.c.b16 %v1286, %v1282
    %v1663 = vpack.c.b16 %v1287, %v1283
    %v1664 = vpack.c.b16 %v1288, %v1284
    %v1665 = vpack.c.b16 %v1293, %v1289
    %v1666 = vpack.c.b16 %v1294, %v1290
    %v1667 = vpack.c.b16 %v1295, %v1291
    %v1668 = vpack.c.b16 %v1296, %v1292
    %v1669 = vpack.c.b16 %v1301, %v1297
    %v1670 = vpack.c.b16 %v1302, %v1298
    %v1671 = vpack.c.b16 %v1303, %v1299
    %v1672 = vpack.c.b16 %v1304, %v1300
    %v1673 = vpack.c.b16 %v1309, %v1305
    %v1674 = vpack.c.b16 %v1310, %v1306
    %v1675 = vpack.c.b16 %v1311, %v1307
    %v1676 = vpack.c.b16 %v1312, %v1308
    %v1677 = vpack.c.b16 %v1317, %v1313
    %v1678 = vpack.c.b16 %v1318, %v1314
    %v1679 = vpack.c.b16 %v1319, %v1315
    %v1680 = vpack.c.b16 %v1320, %v1316
    %v1681 = vpack.c.b16 %v1325, %v1321
    %v1682 = vpack.c.b16 %v1326, %v1322
    %v1683 = vpack.c.b16 %v1327, %v1323
    %v1684 = vpack.c.b16 %v1328, %v1324
    %v1685 = vpack.c.b16 %v1333, %v1329
    %v1686 = vpack.c.b16 %v1334, %v1330
    %v1687 = vpack.c.b16 %v1335, %v1331
    %v1688 = vpack.c.b16 %v1336, %v1332
    %v1689 = vpack.c.b16 %v1341, %v1337
    %v1690 = vpack.c.b16 %v1342, %v1338
    %v1691 = vpack.c.b16 %v1343, %v1339
    %v1692 = vpack.c.b16 %v1344, %v1340
    %v1693 = vpack.c.b16 %v1349, %v1345
    %v1694 = vpack.c.b16 %v1350, %v1346
    %v1695 = vpack.c.b16 %v1351, %v1347
    %v1696 = vpack.c.b16 %v1352, %v1348
    %v1697 = vpack.c.b16 %v1357, %v1353
    %v1698 = vpack.c.b16 %v1358, %v1354
    %v1699 = vpack.c.b16 %v1359, %v1355
    %v1700 = vpack.c.b16 %v1360, %v1356
    %v1701 = vpack.c.b16 %v1365, %v1361
    %v1702 = vpack.c.b16 %v1366, %v1362
    %v1703 = vpack.c.b16 %v1367, %v1363
    %v1704 = vpack.c.b16 %v1368, %v1364
    %v1705 = vpack.c.b16 %v1373, %v1369
    %v1706 = vpack.c.b16 %v1374, %v1370
    %v1707 = vpack.c.b16 %v1375, %v1371
    %v1708 = vpack.c.b16 %v1376, %v1372
    %v1709 = vpack.c.b16 %v1381, %v1377
    %v1710 = vpack.c.b16 %v1382, %v1378
    %v1711 = vpack.c.b16 %v1383, %v1379
    %v1712 = vpack.c.b16 %v1384, %v1380
    %v1713 = vpack.c.b16 %v1389, %v1385
    %v1714 = vpack.c.b16 %v1390, %v1386
    %v1715 = vpack.c.b16 %v1391, %v1387
    %v1716 = vpack.c.b16 %v1392, %v1388
    %v1717 = vpack.c.b16 %v1397, %v1393
    %v1718 = vpack.c.b16 %v1398, %v1394
    %v1719 = vpack.c.b16 %v1399, %v1395
    %v1720 = vpack.c.b16 %v1400, %v1396
    %2041 = vmatpush.bf16.msra.mxu0 %v1429
    %2042 = vmatpush.bf16.msra.mxu0 %v1425
    %2043 = vmatpush.bf16.msra.mxu0 %v1421
    %2044 = vmatpush.bf16.msra.mxu0 %v1417
    %2045 = vmatpush.bf16.msra.mxu0 %v1413
    %2046 = vmatpush.bf16.msra.mxu0 %v1409
    %2047 = vmatpush.bf16.msra.mxu0 %v1405
    %2048 = vmatpush.bf16.msra.mxu0 %v1401
    %2049 = vmatmul.bf16.gmra.mxu0 %v421
    %v2050 = vpop.f32.mrf.mxu0
    %v2051 = vadd.f32 %v398, %v2050
    %v2052 = vpop.f32.mrf.mxu0
    %2053 = vdwg.mxu0
    %2054 = vmatpush.bf16.msra.mxu0 %v1461
    %2055 = vmatpush.bf16.msra.mxu0 %v1457
    %2056 = vmatpush.bf16.msra.mxu0 %v1453
    %2057 = vmatpush.bf16.msra.mxu0 %v1449
    %2058 = vmatpush.bf16.msra.mxu0 %v1445
    %2059 = vmatpush.bf16.msra.mxu0 %v1441
    %2060 = vmatpush.bf16.msra.mxu0 %v1437
    %2061 = vmatpush.bf16.msra.mxu0 %v1433
    %2062 = vmatmul.bf16.gmra.mxu0 %v422
    %v2063 = vpop.f32.mrf.mxu0
    %v2064 = vadd.f32 %v2051, %v2063
    %v2065 = vpop.f32.mrf.mxu0
    %2066 = vdwg.mxu0
    %2067 = vmatpush.bf16.msra.mxu0 %v1493
    %2068 = vmatpush.bf16.msra.mxu0 %v1489
    %2069 = vmatpush.bf16.msra.mxu0 %v1485
    %2070 = vmatpush.bf16.msra.mxu0 %v1481
    %2071 = vmatpush.bf16.msra.mxu0 %v1477
    %2072 = vmatpush.bf16.msra.mxu0 %v1473
    %2073 = vmatpush.bf16.msra.mxu0 %v1469
    %2074 = vmatpush.bf16.msra.mxu0 %v1465
    %2075 = vmatmul.bf16.gmra.mxu0 %v423
    %v2076 = vpop.f32.mrf.mxu0
    %v2077 = vadd.f32 %v2064, %v2076
    %v2078 = vpop.f32.mrf.mxu0
    %2079 = vdwg.mxu0
    %2080 = vmatpush.bf16.msra.mxu0 %v1525
    %2081 = vmatpush.bf16.msra.mxu0 %v1521
    %2082 = vmatpush.bf16.msra.mxu0 %v1517
    %2083 = vmatpush.bf16.msra.mxu0 %v1513
    %2084 = vmatpush.bf16.msra.mxu0 %v1509
    %2085 = vmatpush.bf16.msra.mxu0 %v1505
    %2086 = vmatpush.bf16.msra.mxu0 %v1501
    %2087 = vmatpush.bf16.msra.mxu0 %v1497
    %2088 = vmatmul.bf16.gmra.mxu0 %v424
    %v2089 = vpop.f32.mrf.mxu0
    %v2090 = vadd.f32 %v2077, %v2089
    %v2091 = vpop.f32.mrf.mxu0
    %2092 = vdwg.mxu0
    %2093 = vmatpush.bf16.msra.mxu0 %v1557
    %2094 = vmatpush.bf16.msra.mxu0 %v1553
    %2095 = vmatpush.bf16.msra.mxu0 %v1549
    %2096 = vmatpush.bf16.msra.mxu0 %v1545
    %2097 = vmatpush.bf16.msra.mxu0 %v1541
    %2098 = vmatpush.bf16.msra.mxu0 %v1537
    %2099 = vmatpush.bf16.msra.mxu0 %v1533
    %2100 = vmatpush.bf16.msra.mxu0 %v1529
    %2101 = vmatmul.bf16.gmra.mxu0 %v425
    %v2102 = vpop.f32.mrf.mxu0
    %v2103 = vadd.f32 %v2090, %v2102
    %v2104 = vpop.f32.mrf.mxu0
    %2105 = vdwg.mxu0
    %2106 = vmatpush.bf16.msra.mxu0 %v1589
    %2107 = vmatpush.bf16.msra.mxu0 %v1585
    %2108 = vmatpush.bf16.msra.mxu0 %v1581
    %2109 = vmatpush.bf16.msra.mxu0 %v1577
    %2110 = vmatpush.bf16.msra.mxu0 %v1573
    %2111 = vmatpush.bf16.msra.mxu0 %v1569
    %2112 = vmatpush.bf16.msra.mxu0 %v1565
    %2113 = vmatpush.bf16.msra.mxu0 %v1561
    %2114 = vmatmul.bf16.gmra.mxu0 %v426
    %v2115 = vpop.f32.mrf.mxu0
    %v2116 = vadd.f32 %v2103, %v2115
    %v2117 = vpop.f32.mrf.mxu0
    %2118 = vdwg.mxu0
    %2119 = vmatpush.bf16.msra.mxu0 %v1621
    %2120 = vmatpush.bf16.msra.mxu0 %v1617
    %2121 = vmatpush.bf16.msra.mxu0 %v1613
    %2122 = vmatpush.bf16.msra.mxu0 %v1609
    %2123 = vmatpush.bf16.msra.mxu0 %v1605
    %2124 = vmatpush.bf16.msra.mxu0 %v1601
    %2125 = vmatpush.bf16.msra.mxu0 %v1597
    %2126 = vmatpush.bf16.msra.mxu0 %v1593
    %2127 = vmatmul.bf16.gmra.mxu0 %v427
    %v2128 = vpop.f32.mrf.mxu0
    %v2129 = vadd.f32 %v2116, %v2128
    %v2130 = vpop.f32.mrf.mxu0
    %2131 = vdwg.mxu0
    %2132 = vmatpush.bf16.msra.mxu0 %v1653
    %2133 = vmatpush.bf16.msra.mxu0 %v1649
    %2134 = vmatpush.bf16.msra.mxu0 %v1645
    %2135 = vmatpush.bf16.msra.mxu0 %v1641
    %2136 = vmatpush.bf16.msra.mxu0 %v1637
    %2137 = vmatpush.bf16.msra.mxu0 %v1633
    %2138 = vmatpush.bf16.msra.mxu0 %v1629
    %2139 = vmatpush.bf16.msra.mxu0 %v1625
    %2140 = vmatmul.bf16.gmra.mxu0 %v428
    %v2141 = vpop.f32.mrf.mxu0
    %v2142 = vadd.f32 %v2129, %v2141
    %v2143 = vpop.f32.mrf.mxu0
    %2144 = vdwg.mxu0
    %2145 = vmatpush.bf16.msra.mxu0 %v1685
    %2146 = vmatpush.bf16.msra.mxu0 %v1681
    %2147 = vmatpush.bf16.msra.mxu0 %v1677
    %2148 = vmatpush.bf16.msra.mxu0 %v1673
    %2149 = vmatpush.bf16.msra.mxu0 %v1669
    %2150 = vmatpush.bf16.msra.mxu0 %v1665
    %2151 = vmatpush.bf16.msra.mxu0 %v1661
    %2152 = vmatpush.bf16.msra.mxu0 %v1657
    %2153 = vmatmul.bf16.gmra.mxu0 %v429
    %v2154 = vpop.f32.mrf.mxu0
    %v2155 = vadd.f32 %v2142, %v2154
    %v2156 = vpop.f32.mrf.mxu0
    %2157 = vdwg.mxu0
    %2158 = vmatpush.bf16.msra.mxu0 %v1717
    %2159 = vmatpush.bf16.msra.mxu0 %v1713
    %2160 = vmatpush.bf16.msra.mxu0 %v1709
    %2161 = vmatpush.bf16.msra.mxu0 %v1705
    %2162 = vmatpush.bf16.msra.mxu0 %v1701
    %2163 = vmatpush.bf16.msra.mxu0 %v1697
    %2164 = vmatpush.bf16.msra.mxu0 %v1693
    %2165 = vmatpush.bf16.msra.mxu0 %v1689
    %2166 = vmatmul.bf16.gmra.mxu0 %v430
    %v2167 = vpop.f32.mrf.mxu0
    %v2168 = vadd.f32 %v2155, %v2167
    %v2169 = vpop.f32.mrf.mxu0
    %2170 = vdwg.mxu0
    %2171 = vmatpush.bf16.msra.mxu0 %v1430
    %2172 = vmatpush.bf16.msra.mxu0 %v1426
    %2173 = vmatpush.bf16.msra.mxu0 %v1422
    %2174 = vmatpush.bf16.msra.mxu0 %v1418
    %2175 = vmatpush.bf16.msra.mxu0 %v1414
    %2176 = vmatpush.bf16.msra.mxu0 %v1410
    %2177 = vmatpush.bf16.msra.mxu0 %v1406
    %2178 = vmatpush.bf16.msra.mxu0 %v1402
    %2179 = vmatmul.bf16.gmra.mxu0 %v421
    %v2180 = vpop.f32.mrf.mxu0
    %v2181 = vadd.f32 %v399, %v2180
    %v2182 = vpop.f32.mrf.mxu0
    %2183 = vdwg.mxu0
    %2184 = vmatpush.bf16.msra.mxu0 %v1462
    %2185 = vmatpush.bf16.msra.mxu0 %v1458
    %2186 = vmatpush.bf16.msra.mxu0 %v1454
    %2187 = vmatpush.bf16.msra.mxu0 %v1450
    %2188 = vmatpush.bf16.msra.mxu0 %v1446
    %2189 = vmatpush.bf16.msra.mxu0 %v1442
    %2190 = vmatpush.bf16.msra.mxu0 %v1438
    %2191 = vmatpush.bf16.msra.mxu0 %v1434
    %2192 = vmatmul.bf16.gmra.mxu0 %v422
    %v2193 = vpop.f32.mrf.mxu0
    %v2194 = vadd.f32 %v2181, %v2193
    %v2195 = vpop.f32.mrf.mxu0
    %2196 = vdwg.mxu0
    %2197 = vmatpush.bf16.msra.mxu0 %v1494
    %2198 = vmatpush.bf16.msra.mxu0 %v1490
    %2199 = vmatpush.bf16.msra.mxu0 %v1486
    %2200 = vmatpush.bf16.msra.mxu0 %v1482
    %2201 = vmatpush.bf16.msra.mxu0 %v1478
    %2202 = vmatpush.bf16.msra.mxu0 %v1474
    %2203 = vmatpush.bf16.msra.mxu0 %v1470
    %2204 = vmatpush.bf16.msra.mxu0 %v1466
    %2205 = vmatmul.bf16.gmra.mxu0 %v423
    %v2206 = vpop.f32.mrf.mxu0
    %v2207 = vadd.f32 %v2194, %v2206
    %v2208 = vpop.f32.mrf.mxu0
    %2209 = vdwg.mxu0
    %2210 = vmatpush.bf16.msra.mxu0 %v1526
    %2211 = vmatpush.bf16.msra.mxu0 %v1522
    %2212 = vmatpush.bf16.msra.mxu0 %v1518
    %2213 = vmatpush.bf16.msra.mxu0 %v1514
    %2214 = vmatpush.bf16.msra.mxu0 %v1510
    %2215 = vmatpush.bf16.msra.mxu0 %v1506
    %2216 = vmatpush.bf16.msra.mxu0 %v1502
    %2217 = vmatpush.bf16.msra.mxu0 %v1498
    %2218 = vmatmul.bf16.gmra.mxu0 %v424
    %v2219 = vpop.f32.mrf.mxu0
    %v2220 = vadd.f32 %v2207, %v2219
    %v2221 = vpop.f32.mrf.mxu0
    %2222 = vdwg.mxu0
    %2223 = vmatpush.bf16.msra.mxu0 %v1558
    %2224 = vmatpush.bf16.msra.mxu0 %v1554
    %2225 = vmatpush.bf16.msra.mxu0 %v1550
    %2226 = vmatpush.bf16.msra.mxu0 %v1546
    %2227 = vmatpush.bf16.msra.mxu0 %v1542
    %2228 = vmatpush.bf16.msra.mxu0 %v1538
    %2229 = vmatpush.bf16.msra.mxu0 %v1534
    %2230 = vmatpush.bf16.msra.mxu0 %v1530
    %2231 = vmatmul.bf16.gmra.mxu0 %v425
    %v2232 = vpop.f32.mrf.mxu0
    %v2233 = vadd.f32 %v2220, %v2232
    %v2234 = vpop.f32.mrf.mxu0
    %2235 = vdwg.mxu0
    %2236 = vmatpush.bf16.msra.mxu0 %v1590
    %2237 = vmatpush.bf16.msra.mxu0 %v1586
    %2238 = vmatpush.bf16.msra.mxu0 %v1582
    %2239 = vmatpush.bf16.msra.mxu0 %v1578
    %2240 = vmatpush.bf16.msra.mxu0 %v1574
    %2241 = vmatpush.bf16.msra.mxu0 %v1570
    %2242 = vmatpush.bf16.msra.mxu0 %v1566
    %2243 = vmatpush.bf16.msra.mxu0 %v1562
    %2244 = vmatmul.bf16.gmra.mxu0 %v426
    %v2245 = vpop.f32.mrf.mxu0
    %v2246 = vadd.f32 %v2233, %v2245
    %v2247 = vpop.f32.mrf.mxu0
    %2248 = vdwg.mxu0
    %2249 = vmatpush.bf16.msra.mxu0 %v1622
    %2250 = vmatpush.bf16.msra.mxu0 %v1618
    %2251 = vmatpush.bf16.msra.mxu0 %v1614
    %2252 = vmatpush.bf16.msra.mxu0 %v1610
    %2253 = vmatpush.bf16.msra.mxu0 %v1606
    %2254 = vmatpush.bf16.msra.mxu0 %v1602
    %2255 = vmatpush.bf16.msra.mxu0 %v1598
    %2256 = vmatpush.bf16.msra.mxu0 %v1594
    %2257 = vmatmul.bf16.gmra.mxu0 %v427
    %v2258 = vpop.f32.mrf.mxu0
    %v2259 = vadd.f32 %v2246, %v2258
    %v2260 = vpop.f32.mrf.mxu0
    %2261 = vdwg.mxu0
    %2262 = vmatpush.bf16.msra.mxu0 %v1654
    %2263 = vmatpush.bf16.msra.mxu0 %v1650
    %2264 = vmatpush.bf16.msra.mxu0 %v1646
    %2265 = vmatpush.bf16.msra.mxu0 %v1642
    %2266 = vmatpush.bf16.msra.mxu0 %v1638
    %2267 = vmatpush.bf16.msra.mxu0 %v1634
    %2268 = vmatpush.bf16.msra.mxu0 %v1630
    %2269 = vmatpush.bf16.msra.mxu0 %v1626
    %2270 = vmatmul.bf16.gmra.mxu0 %v428
    %v2271 = vpop.f32.mrf.mxu0
    %v2272 = vadd.f32 %v2259, %v2271
    %v2273 = vpop.f32.mrf.mxu0
    %2274 = vdwg.mxu0
    %2275 = vmatpush.bf16.msra.mxu0 %v1686
    %2276 = vmatpush.bf16.msra.mxu0 %v1682
    %2277 = vmatpush.bf16.msra.mxu0 %v1678
    %2278 = vmatpush.bf16.msra.mxu0 %v1674
    %2279 = vmatpush.bf16.msra.mxu0 %v1670
    %2280 = vmatpush.bf16.msra.mxu0 %v1666
    %2281 = vmatpush.bf16.msra.mxu0 %v1662
    %2282 = vmatpush.bf16.msra.mxu0 %v1658
    %2283 = vmatmul.bf16.gmra.mxu0 %v429
    %v2284 = vpop.f32.mrf.mxu0
    %v2285 = vadd.f32 %v2272, %v2284
    %v2286 = vpop.f32.mrf.mxu0
    %2287 = vdwg.mxu0
    %2288 = vmatpush.bf16.msra.mxu0 %v1718
    %2289 = vmatpush.bf16.msra.mxu0 %v1714
    %2290 = vmatpush.bf16.msra.mxu0 %v1710
    %2291 = vmatpush.bf16.msra.mxu0 %v1706
    %2292 = vmatpush.bf16.msra.mxu0 %v1702
    %2293 = vmatpush.bf16.msra.mxu0 %v1698
    %2294 = vmatpush.bf16.msra.mxu0 %v1694
    %2295 = vmatpush.bf16.msra.mxu0 %v1690
    %2296 = vmatmul.bf16.gmra.mxu0 %v430
    %v2297 = vpop.f32.mrf.mxu0
    %v2298 = vadd.f32 %v2285, %v2297
    %v2299 = vpop.f32.mrf.mxu0
    %2300 = vdwg.mxu0
    %2301 = vmatpush.bf16.msra.mxu0 %v1431
    %2302 = vmatpush.bf16.msra.mxu0 %v1427
    %2303 = vmatpush.bf16.msra.mxu0 %v1423
    %2304 = vmatpush.bf16.msra.mxu0 %v1419
    %2305 = vmatpush.bf16.msra.mxu0 %v1415
    %2306 = vmatpush.bf16.msra.mxu0 %v1411
    %2307 = vmatpush.bf16.msra.mxu0 %v1407
    %2308 = vmatpush.bf16.msra.mxu0 %v1403
    %2309 = vmatmul.bf16.gmra.mxu0 %v421
    %v2310 = vpop.f32.mrf.mxu0
    %v2311 = vadd.f32 %v400, %v2310
    %v2312 = vpop.f32.mrf.mxu0
    %2313 = vdwg.mxu0
    %2314 = vmatpush.bf16.msra.mxu0 %v1463
    %2315 = vmatpush.bf16.msra.mxu0 %v1459
    %2316 = vmatpush.bf16.msra.mxu0 %v1455
    %2317 = vmatpush.bf16.msra.mxu0 %v1451
    %2318 = vmatpush.bf16.msra.mxu0 %v1447
    %2319 = vmatpush.bf16.msra.mxu0 %v1443
    %2320 = vmatpush.bf16.msra.mxu0 %v1439
    %2321 = vmatpush.bf16.msra.mxu0 %v1435
    %2322 = vmatmul.bf16.gmra.mxu0 %v422
    %v2323 = vpop.f32.mrf.mxu0
    %v2324 = vadd.f32 %v2311, %v2323
    %v2325 = vpop.f32.mrf.mxu0
    %2326 = vdwg.mxu0
    %2327 = vmatpush.bf16.msra.mxu0 %v1495
    %2328 = vmatpush.bf16.msra.mxu0 %v1491
    %2329 = vmatpush.bf16.msra.mxu0 %v1487
    %2330 = vmatpush.bf16.msra.mxu0 %v1483
    %2331 = vmatpush.bf16.msra.mxu0 %v1479
    %2332 = vmatpush.bf16.msra.mxu0 %v1475
    %2333 = vmatpush.bf16.msra.mxu0 %v1471
    %2334 = vmatpush.bf16.msra.mxu0 %v1467
    %2335 = vmatmul.bf16.gmra.mxu0 %v423
    %v2336 = vpop.f32.mrf.mxu0
    %v2337 = vadd.f32 %v2324, %v2336
    %v2338 = vpop.f32.mrf.mxu0
    %2339 = vdwg.mxu0
    %2340 = vmatpush.bf16.msra.mxu0 %v1527
    %2341 = vmatpush.bf16.msra.mxu0 %v1523
    %2342 = vmatpush.bf16.msra.mxu0 %v1519
    %2343 = vmatpush.bf16.msra.mxu0 %v1515
    %2344 = vmatpush.bf16.msra.mxu0 %v1511
    %2345 = vmatpush.bf16.msra.mxu0 %v1507
    %2346 = vmatpush.bf16.msra.mxu0 %v1503
    %2347 = vmatpush.bf16.msra.mxu0 %v1499
    %2348 = vmatmul.bf16.gmra.mxu0 %v424
    %v2349 = vpop.f32.mrf.mxu0
    %v2350 = vadd.f32 %v2337, %v2349
    %v2351 = vpop.f32.mrf.mxu0
    %2352 = vdwg.mxu0
    %2353 = vmatpush.bf16.msra.mxu0 %v1559
    %2354 = vmatpush.bf16.msra.mxu0 %v1555
    %2355 = vmatpush.bf16.msra.mxu0 %v1551
    %2356 = vmatpush.bf16.msra.mxu0 %v1547
    %2357 = vmatpush.bf16.msra.mxu0 %v1543
    %2358 = vmatpush.bf16.msra.mxu0 %v1539
    %2359 = vmatpush.bf16.msra.mxu0 %v1535
    %2360 = vmatpush.bf16.msra.mxu0 %v1531
    %2361 = vmatmul.bf16.gmra.mxu0 %v425
    %v2362 = vpop.f32.mrf.mxu0
    %v2363 = vadd.f32 %v2350, %v2362
    %v2364 = vpop.f32.mrf.mxu0
    %2365 = vdwg.mxu0
    %2366 = vmatpush.bf16.msra.mxu0 %v1591
    %2367 = vmatpush.bf16.msra.mxu0 %v1587
    %2368 = vmatpush.bf16.msra.mxu0 %v1583
    %2369 = vmatpush.bf16.msra.mxu0 %v1579
    %2370 = vmatpush.bf16.msra.mxu0 %v1575
    %2371 = vmatpush.bf16.msra.mxu0 %v1571
    %2372 = vmatpush.bf16.msra.mxu0 %v1567
    %2373 = vmatpush.bf16.msra.mxu0 %v1563
    %2374 = vmatmul.bf16.gmra.mxu0 %v426
    %v2375 = vpop.f32.mrf.mxu0
    %v2376 = vadd.f32 %v2363, %v2375
    %v2377 = vpop.f32.mrf.mxu0
    %2378 = vdwg.mxu0
    %2379 = vmatpush.bf16.msra.mxu0 %v1623
    %2380 = vmatpush.bf16.msra.mxu0 %v1619
    %2381 = vmatpush.bf16.msra.mxu0 %v1615
    %2382 = vmatpush.bf16.msra.mxu0 %v1611
    %2383 = vmatpush.bf16.msra.mxu0 %v1607
    %2384 = vmatpush.bf16.msra.mxu0 %v1603
    %2385 = vmatpush.bf16.msra.mxu0 %v1599
    %2386 = vmatpush.bf16.msra.mxu0 %v1595
    %2387 = vmatmul.bf16.gmra.mxu0 %v427
    %v2388 = vpop.f32.mrf.mxu0
    %v2389 = vadd.f32 %v2376, %v2388
    %v2390 = vpop.f32.mrf.mxu0
    %2391 = vdwg.mxu0
    %2392 = vmatpush.bf16.msra.mxu0 %v1655
    %2393 = vmatpush.bf16.msra.mxu0 %v1651
    %2394 = vmatpush.bf16.msra.mxu0 %v1647
    %2395 = vmatpush.bf16.msra.mxu0 %v1643
    %2396 = vmatpush.bf16.msra.mxu0 %v1639
    %2397 = vmatpush.bf16.msra.mxu0 %v1635
    %2398 = vmatpush.bf16.msra.mxu0 %v1631
    %2399 = vmatpush.bf16.msra.mxu0 %v1627
    %2400 = vmatmul.bf16.gmra.mxu0 %v428
    %v2401 = vpop.f32.mrf.mxu0
    %v2402 = vadd.f32 %v2389, %v2401
    %v2403 = vpop.f32.mrf.mxu0
    %2404 = vdwg.mxu0
    %2405 = vmatpush.bf16.msra.mxu0 %v1687
    %2406 = vmatpush.bf16.msra.mxu0 %v1683
    %2407 = vmatpush.bf16.msra.mxu0 %v1679
    %2408 = vmatpush.bf16.msra.mxu0 %v1675
    %2409 = vmatpush.bf16.msra.mxu0 %v1671
    %2410 = vmatpush.bf16.msra.mxu0 %v1667
    %2411 = vmatpush.bf16.msra.mxu0 %v1663
    %2412 = vmatpush.bf16.msra.mxu0 %v1659
    %2413 = vmatmul.bf16.gmra.mxu0 %v429
    %v2414 = vpop.f32.mrf.mxu0
    %v2415 = vadd.f32 %v2402, %v2414
    %v2416 = vpop.f32.mrf.mxu0
    %2417 = vdwg.mxu0
    %2418 = vmatpush.bf16.msra.mxu0 %v1719
    %2419 = vmatpush.bf16.msra.mxu0 %v1715
    %2420 = vmatpush.bf16.msra.mxu0 %v1711
    %2421 = vmatpush.bf16.msra.mxu0 %v1707
    %2422 = vmatpush.bf16.msra.mxu0 %v1703
    %2423 = vmatpush.bf16.msra.mxu0 %v1699
    %2424 = vmatpush.bf16.msra.mxu0 %v1695
    %2425 = vmatpush.bf16.msra.mxu0 %v1691
    %2426 = vmatmul.bf16.gmra.mxu0 %v430
    %v2427 = vpop.f32.mrf.mxu0
    %v2428 = vadd.f32 %v2415, %v2427
    %v2429 = vpop.f32.mrf.mxu0
    %2430 = vdwg.mxu0
    %2431 = vmatpush.bf16.msra.mxu0 %v1432
    %2432 = vmatpush.bf16.msra.mxu0 %v1428
    %2433 = vmatpush.bf16.msra.mxu0 %v1424
    %2434 = vmatpush.bf16.msra.mxu0 %v1420
    %2435 = vmatpush.bf16.msra.mxu0 %v1416
    %2436 = vmatpush.bf16.msra.mxu0 %v1412
    %2437 = vmatpush.bf16.msra.mxu0 %v1408
    %2438 = vmatpush.bf16.msra.mxu0 %v1404
    %2439 = vmatmul.bf16.gmra.mxu0 %v421
    %v2440 = vpop.f32.mrf.mxu0
    %v2441 = vadd.f32 %v401, %v2440
    %v2442 = vpop.f32.mrf.mxu0
    %2443 = vdwg.mxu0
    %2444 = vmatpush.bf16.msra.mxu0 %v1464
    %2445 = vmatpush.bf16.msra.mxu0 %v1460
    %2446 = vmatpush.bf16.msra.mxu0 %v1456
    %2447 = vmatpush.bf16.msra.mxu0 %v1452
    %2448 = vmatpush.bf16.msra.mxu0 %v1448
    %2449 = vmatpush.bf16.msra.mxu0 %v1444
    %2450 = vmatpush.bf16.msra.mxu0 %v1440
    %2451 = vmatpush.bf16.msra.mxu0 %v1436
    %2452 = vmatmul.bf16.gmra.mxu0 %v422
    %v2453 = vpop.f32.mrf.mxu0
    %v2454 = vadd.f32 %v2441, %v2453
    %v2455 = vpop.f32.mrf.mxu0
    %2456 = vdwg.mxu0
    %2457 = vmatpush.bf16.msra.mxu0 %v1496
    %2458 = vmatpush.bf16.msra.mxu0 %v1492
    %2459 = vmatpush.bf16.msra.mxu0 %v1488
    %2460 = vmatpush.bf16.msra.mxu0 %v1484
    %2461 = vmatpush.bf16.msra.mxu0 %v1480
    %2462 = vmatpush.bf16.msra.mxu0 %v1476
    %2463 = vmatpush.bf16.msra.mxu0 %v1472
    %2464 = vmatpush.bf16.msra.mxu0 %v1468
    %2465 = vmatmul.bf16.gmra.mxu0 %v423
    %v2466 = vpop.f32.mrf.mxu0
    %v2467 = vadd.f32 %v2454, %v2466
    %v2468 = vpop.f32.mrf.mxu0
    %2469 = vdwg.mxu0
    %2470 = vmatpush.bf16.msra.mxu0 %v1528
    %2471 = vmatpush.bf16.msra.mxu0 %v1524
    %2472 = vmatpush.bf16.msra.mxu0 %v1520
    %2473 = vmatpush.bf16.msra.mxu0 %v1516
    %2474 = vmatpush.bf16.msra.mxu0 %v1512
    %2475 = vmatpush.bf16.msra.mxu0 %v1508
    %2476 = vmatpush.bf16.msra.mxu0 %v1504
    %2477 = vmatpush.bf16.msra.mxu0 %v1500
    %2478 = vmatmul.bf16.gmra.mxu0 %v424
    %v2479 = vpop.f32.mrf.mxu0
    %v2480 = vadd.f32 %v2467, %v2479
    %v2481 = vpop.f32.mrf.mxu0
    %2482 = vdwg.mxu0
    %2483 = vmatpush.bf16.msra.mxu0 %v1560
    %2484 = vmatpush.bf16.msra.mxu0 %v1556
    %2485 = vmatpush.bf16.msra.mxu0 %v1552
    %2486 = vmatpush.bf16.msra.mxu0 %v1548
    %2487 = vmatpush.bf16.msra.mxu0 %v1544
    %2488 = vmatpush.bf16.msra.mxu0 %v1540
    %2489 = vmatpush.bf16.msra.mxu0 %v1536
    %2490 = vmatpush.bf16.msra.mxu0 %v1532
    %2491 = vmatmul.bf16.gmra.mxu0 %v425
    %v2492 = vpop.f32.mrf.mxu0
    %v2493 = vadd.f32 %v2480, %v2492
    %v2494 = vpop.f32.mrf.mxu0
    %2495 = vdwg.mxu0
    %2496 = vmatpush.bf16.msra.mxu0 %v1592
    %2497 = vmatpush.bf16.msra.mxu0 %v1588
    %2498 = vmatpush.bf16.msra.mxu0 %v1584
    %2499 = vmatpush.bf16.msra.mxu0 %v1580
    %2500 = vmatpush.bf16.msra.mxu0 %v1576
    %2501 = vmatpush.bf16.msra.mxu0 %v1572
    %2502 = vmatpush.bf16.msra.mxu0 %v1568
    %2503 = vmatpush.bf16.msra.mxu0 %v1564
    %2504 = vmatmul.bf16.gmra.mxu0 %v426
    %v2505 = vpop.f32.mrf.mxu0
    %v2506 = vadd.f32 %v2493, %v2505
    %v2507 = vpop.f32.mrf.mxu0
    %2508 = vdwg.mxu0
    %2509 = vmatpush.bf16.msra.mxu0 %v1624
    %2510 = vmatpush.bf16.msra.mxu0 %v1620
    %2511 = vmatpush.bf16.msra.mxu0 %v1616
    %2512 = vmatpush.bf16.msra.mxu0 %v1612
    %2513 = vmatpush.bf16.msra.mxu0 %v1608
    %2514 = vmatpush.bf16.msra.mxu0 %v1604
    %2515 = vmatpush.bf16.msra.mxu0 %v1600
    %2516 = vmatpush.bf16.msra.mxu0 %v1596
    %2517 = vmatmul.bf16.gmra.mxu0 %v427
    %v2518 = vpop.f32.mrf.mxu0
    %v2519 = vadd.f32 %v2506, %v2518
    %v2520 = vpop.f32.mrf.mxu0
    %2521 = vdwg.mxu0
    %2522 = vmatpush.bf16.msra.mxu0 %v1656
    %2523 = vmatpush.bf16.msra.mxu0 %v1652
    %2524 = vmatpush.bf16.msra.mxu0 %v1648
    %2525 = vmatpush.bf16.msra.mxu0 %v1644
    %2526 = vmatpush.bf16.msra.mxu0 %v1640
    %2527 = vmatpush.bf16.msra.mxu0 %v1636
    %2528 = vmatpush.bf16.msra.mxu0 %v1632
    %2529 = vmatpush.bf16.msra.mxu0 %v1628
    %2530 = vmatmul.bf16.gmra.mxu0 %v428
    %v2531 = vpop.f32.mrf.mxu0
    %v2532 = vadd.f32 %v2519, %v2531
    %v2533 = vpop.f32.mrf.mxu0
    %2534 = vdwg.mxu0
    %2535 = vmatpush.bf16.msra.mxu0 %v1688
    %2536 = vmatpush.bf16.msra.mxu0 %v1684
    %2537 = vmatpush.bf16.msra.mxu0 %v1680
    %2538 = vmatpush.bf16.msra.mxu0 %v1676
    %2539 = vmatpush.bf16.msra.mxu0 %v1672
    %2540 = vmatpush.bf16.msra.mxu0 %v1668
    %2541 = vmatpush.bf16.msra.mxu0 %v1664
    %2542 = vmatpush.bf16.msra.mxu0 %v1660
    %2543 = vmatmul.bf16.gmra.mxu0 %v429
    %v2544 = vpop.f32.mrf.mxu0
    %v2545 = vadd.f32 %v2532, %v2544
    %v2546 = vpop.f32.mrf.mxu0
    %2547 = vdwg.mxu0
    %2548 = vmatpush.bf16.msra.mxu0 %v1720
    %2549 = vmatpush.bf16.msra.mxu0 %v1716
    %2550 = vmatpush.bf16.msra.mxu0 %v1712
    %2551 = vmatpush.bf16.msra.mxu0 %v1708
    %2552 = vmatpush.bf16.msra.mxu0 %v1704
    %2553 = vmatpush.bf16.msra.mxu0 %v1700
    %2554 = vmatpush.bf16.msra.mxu0 %v1696
    %2555 = vmatpush.bf16.msra.mxu0 %v1692
    %2556 = vmatmul.bf16.gmra.mxu0 %v430
    %v2557 = vpop.f32.mrf.mxu0
    %v2558 = vadd.f32 %v2545, %v2557
    %v2559 = vpop.f32.mrf.mxu0
    %2560 = vdwg.mxu0
    %v2561 = vmax.f32 %v2168, 0.0
    %v2562 = vmax.f32 %v2298, 0.0
    %v2563 = vmax.f32 %v2428, 0.0
    %v2564 = vmax.f32 %v2558, 0.0
    %v2565 = vpack.c.bf16 %v2561, %v2561
    %v2566 = vpack.c.bf16 %v2562, %v2562
    %v2567 = vpack.c.bf16 %v2563, %v2563
    %v2568 = vpack.c.bf16 %v2564, %v2564
    %v2569 = vld [vmem:[#allocation6] sm:$0xff]
    %v2570 = vld [vmem:[#allocation6 + $0x8] sm:$0xff]
    %v2571 = vld [vmem:[#allocation6 + $0x10] sm:$0xff]
    %v2572 = vld [vmem:[#allocation6 + $0x18] sm:$0xff]
    %v2573 = vld [vmem:[#allocation6 + $0x20] sm:$0xff]
    %v2574 = vld [vmem:[#allocation6 + $0x28] sm:$0xff]
    %v2575 = vld [vmem:[#allocation6 + $0x30] sm:$0xff]
    %v2576 = vld [vmem:[#allocation6 + $0x38] sm:$0xff]
    %v2577 = vld [vmem:[#allocation6 + $0x40] sm:$0xff]
    %v2578 = vld [vmem:[#allocation6 + $0x48] sm:$0xff]
    %v2579 = vld [vmem:[#allocation6 + $0x50] sm:$0xff]
    %v2580 = vld [vmem:[#allocation6 + $0x58] sm:$0xff]
    %v2581 = vld [vmem:[#allocation6 + $0x60] sm:$0xff]
    %v2582 = vld [vmem:[#allocation6 + $0x68] sm:$0xff]
    %v2583 = vld [vmem:[#allocation6 + $0x70] sm:$0xff]
    %v2584 = vld [vmem:[#allocation6 + $0x78] sm:$0xff]
    %v2585 = vld [vmem:[#allocation6 + $0x80] sm:$0xff]
    %v2586 = vld [vmem:[#allocation6 + $0x88] sm:$0xff]
    %v2587 = vld [vmem:[#allocation6 + $0x90] sm:$0xff]
    %v2588 = vld [vmem:[#allocation6 + $0x98] sm:$0xff]
    %v2589 = vld [vmem:[#allocation6 + $0xa0] sm:$0xff]
    %v2590 = vld [vmem:[#allocation6 + $0xa8] sm:$0xff]
    %v2591 = vld [vmem:[#allocation6 + $0xb0] sm:$0xff]
    %v2592 = vld [vmem:[#allocation6 + $0xb8] sm:$0xff]
    %v2593 = vld [vmem:[#allocation6 + $0xc0] sm:$0xff]
    %v2594 = vld [vmem:[#allocation6 + $0xc8] sm:$0xff]
    %v2595 = vld [vmem:[#allocation6 + $0xd0] sm:$0xff]
    %v2596 = vld [vmem:[#allocation6 + $0xd8] sm:$0xff]
    %v2597 = vld [vmem:[#allocation6 + $0xe0] sm:$0xff]
    %v2598 = vld [vmem:[#allocation6 + $0xe8] sm:$0xff]
    %v2599 = vld [vmem:[#allocation6 + $0xf0] sm:$0xff]
    %v2600 = vld [vmem:[#allocation6 + $0xf8] sm:$0xff]
    %v2601 = vld [vmem:[#allocation6 + $0x100] sm:$0xff]
    %v2602 = vld [vmem:[#allocation6 + $0x108] sm:$0xff]
    %v2603 = vld [vmem:[#allocation6 + $0x110] sm:$0xff]
    %v2604 = vld [vmem:[#allocation6 + $0x118] sm:$0xff]
    %v2605 = vld [vmem:[#allocation6 + $0x120] sm:$0xff]
    %v2606 = vld [vmem:[#allocation6 + $0x128] sm:$0xff]
    %v2607 = vld [vmem:[#allocation6 + $0x130] sm:$0xff]
    %v2608 = vld [vmem:[#allocation6 + $0x138] sm:$0xff]
    %v2609 = vld [vmem:[#allocation6 + $0x140] sm:$0xff]
    %v2610 = vld [vmem:[#allocation6 + $0x148] sm:$0xff]
    %v2611 = vld [vmem:[#allocation6 + $0x150] sm:$0xff]
    %v2612 = vld [vmem:[#allocation6 + $0x158] sm:$0xff]
    %v2613 = vld [vmem:[#allocation6 + $0x160] sm:$0xff]
    %v2614 = vld [vmem:[#allocation6 + $0x168] sm:$0xff]
    %v2615 = vld [vmem:[#allocation6 + $0x170] sm:$0xff]
    %v2616 = vld [vmem:[#allocation6 + $0x178] sm:$0xff]
    %v2617 = vld [vmem:[#allocation6 + $0x180] sm:$0xff]
    %v2618 = vld [vmem:[#allocation6 + $0x188] sm:$0xff]
    %v2619 = vld [vmem:[#allocation6 + $0x190] sm:$0xff]
    %v2620 = vld [vmem:[#allocation6 + $0x198] sm:$0xff]
    %v2621 = vld [vmem:[#allocation6 + $0x1a0] sm:$0xff]
    %v2622 = vld [vmem:[#allocation6 + $0x1a8] sm:$0xff]
    %v2623 = vld [vmem:[#allocation6 + $0x1b0] sm:$0xff]
    %v2624 = vld [vmem:[#allocation6 + $0x1b8] sm:$0xff]
    %v2625 = vld [vmem:[#allocation6 + $0x1c0] sm:$0xff]
    %v2626 = vld [vmem:[#allocation6 + $0x1c8] sm:$0xff]
    %v2627 = vld [vmem:[#allocation6 + $0x1d0] sm:$0xff]
    %v2628 = vld [vmem:[#allocation6 + $0x1d8] sm:$0xff]
    %v2629 = vld [vmem:[#allocation6 + $0x1e0] sm:$0xff]
    %v2630 = vld [vmem:[#allocation6 + $0x1e8] sm:$0xff]
    %v2631 = vld [vmem:[#allocation6 + $0x1f0] sm:$0xff]
    %v2632 = vld [vmem:[#allocation6 + $0x1f8] sm:$0xff]
    %v2633 = vld [vmem:[#allocation6 + $0x200] sm:$0xff]
    %v2634 = vld [vmem:[#allocation6 + $0x208] sm:$0xff]
    %v2635 = vld [vmem:[#allocation6 + $0x210] sm:$0xff]
    %v2636 = vld [vmem:[#allocation6 + $0x218] sm:$0xff]
    %v2637 = vld [vmem:[#allocation6 + $0x220] sm:$0xff]
    %v2638 = vld [vmem:[#allocation6 + $0x228] sm:$0xff]
    %v2639 = vld [vmem:[#allocation6 + $0x230] sm:$0xff]
    %v2640 = vld [vmem:[#allocation6 + $0x238] sm:$0xff]
    %v2641 = vld [vmem:[#allocation6 + $0x240] sm:$0xff]
    %v2642 = vld [vmem:[#allocation6 + $0x248] sm:$0xff]
    %v2643 = vld [vmem:[#allocation6 + $0x250] sm:$0xff]
    %v2644 = vld [vmem:[#allocation6 + $0x258] sm:$0xff]
    %v2645 = vld [vmem:[#allocation6 + $0x260] sm:$0xff]
    %v2646 = vld [vmem:[#allocation6 + $0x268] sm:$0xff]
    %v2647 = vld [vmem:[#allocation6 + $0x270] sm:$0xff]
    %v2648 = vld [vmem:[#allocation6 + $0x278] sm:$0xff]
    %v2649 = vld [vmem:[#allocation6 + $0x280] sm:$0xff]
    %v2650 = vld [vmem:[#allocation6 + $0x288] sm:$0xff]
    %v2651 = vld [vmem:[#allocation6 + $0x290] sm:$0xff]
    %v2652 = vld [vmem:[#allocation6 + $0x298] sm:$0xff]
    %v2653 = vld [vmem:[#allocation6 + $0x2a0] sm:$0xff]
    %v2654 = vld [vmem:[#allocation6 + $0x2a8] sm:$0xff]
    %v2655 = vld [vmem:[#allocation6 + $0x2b0] sm:$0xff]
    %v2656 = vld [vmem:[#allocation6 + $0x2b8] sm:$0xff]
    %v2657 = vld [vmem:[#allocation6 + $0x2c0] sm:$0xff]
    %v2658 = vld [vmem:[#allocation6 + $0x2c8] sm:$0xff]
    %v2659 = vld [vmem:[#allocation6 + $0x2d0] sm:$0xff]
    %v2660 = vld [vmem:[#allocation6 + $0x2d8] sm:$0xff]
    %v2661 = vld [vmem:[#allocation6 + $0x2e0] sm:$0xff]
    %v2662 = vld [vmem:[#allocation6 + $0x2e8] sm:$0xff]
    %v2663 = vld [vmem:[#allocation6 + $0x2f0] sm:$0xff]
    %v2664 = vld [vmem:[#allocation6 + $0x2f8] sm:$0xff]
    %v2665 = vld [vmem:[#allocation6 + $0x300] sm:$0xff]
    %v2666 = vld [vmem:[#allocation6 + $0x308] sm:$0xff]
    %v2667 = vld [vmem:[#allocation6 + $0x310] sm:$0xff]
    %v2668 = vld [vmem:[#allocation6 + $0x318] sm:$0xff]
    %v2669 = vld [vmem:[#allocation6 + $0x320] sm:$0xff]
    %v2670 = vld [vmem:[#allocation6 + $0x328] sm:$0xff]
    %v2671 = vld [vmem:[#allocation6 + $0x330] sm:$0xff]
    %v2672 = vld [vmem:[#allocation6 + $0x338] sm:$0xff]
    %v2673 = vld [vmem:[#allocation6 + $0x340] sm:$0xff]
    %v2674 = vld [vmem:[#allocation6 + $0x348] sm:$0xff]
    %v2675 = vld [vmem:[#allocation6 + $0x350] sm:$0xff]
    %v2676 = vld [vmem:[#allocation6 + $0x358] sm:$0xff]
    %v2677 = vld [vmem:[#allocation6 + $0x360] sm:$0xff]
    %v2678 = vld [vmem:[#allocation6 + $0x368] sm:$0xff]
    %v2679 = vld [vmem:[#allocation6 + $0x370] sm:$0xff]
    %v2680 = vld [vmem:[#allocation6 + $0x378] sm:$0xff]
    %v2681 = vld [vmem:[#allocation6 + $0x380] sm:$0xff]
    %v2682 = vld [vmem:[#allocation6 + $0x388] sm:$0xff]
    %v2683 = vld [vmem:[#allocation6 + $0x390] sm:$0xff]
    %v2684 = vld [vmem:[#allocation6 + $0x398] sm:$0xff]
    %v2685 = vld [vmem:[#allocation6 + $0x3a0] sm:$0xff]
    %v2686 = vld [vmem:[#allocation6 + $0x3a8] sm:$0xff]
    %v2687 = vld [vmem:[#allocation6 + $0x3b0] sm:$0xff]
    %v2688 = vld [vmem:[#allocation6 + $0x3b8] sm:$0xff]
    %v2689 = vld [vmem:[#allocation6 + $0x3c0] sm:$0xff]
    %v2690 = vld [vmem:[#allocation6 + $0x3c8] sm:$0xff]
    %v2691 = vld [vmem:[#allocation6 + $0x3d0] sm:$0xff]
    %v2692 = vld [vmem:[#allocation6 + $0x3d8] sm:$0xff]
    %v2693 = vld [vmem:[#allocation6 + $0x3e0] sm:$0xff]
    %v2694 = vld [vmem:[#allocation6 + $0x3e8] sm:$0xff]
    %v2695 = vld [vmem:[#allocation6 + $0x3f0] sm:$0xff]
    %v2696 = vld [vmem:[#allocation6 + $0x3f8] sm:$0xff]
    %v2698 = vperm.slane %v69, 0
    %v2699 = vperm.slane %v69, 1
    %v2700 = vperm.slane %v69, 2
    %v2701 = vperm.slane %v69, 3
    %v2834 = vunpack.c.l.b16 %v2569
    %v2835 = vunpack.c.h.b16 %v2569
    %v2836 = vunpack.c.l.b16 %v2570
    %v2837 = vunpack.c.h.b16 %v2570
    %v2838 = vunpack.c.l.b16 %v2571
    %v2839 = vunpack.c.h.b16 %v2571
    %v2840 = vunpack.c.l.b16 %v2572
    %v2841 = vunpack.c.h.b16 %v2572
    %v2842 = vunpack.c.l.b16 %v2573
    %v2843 = vunpack.c.h.b16 %v2573
    %v2844 = vunpack.c.l.b16 %v2574
    %v2845 = vunpack.c.h.b16 %v2574
    %v2846 = vunpack.c.l.b16 %v2575
    %v2847 = vunpack.c.h.b16 %v2575
    %v2848 = vunpack.c.l.b16 %v2576
    %v2849 = vunpack.c.h.b16 %v2576
    %v2850 = vunpack.c.l.b16 %v2577
    %v2851 = vunpack.c.h.b16 %v2577
    %v2852 = vunpack.c.l.b16 %v2578
    %v2853 = vunpack.c.h.b16 %v2578
    %v2854 = vunpack.c.l.b16 %v2579
    %v2855 = vunpack.c.h.b16 %v2579
    %v2856 = vunpack.c.l.b16 %v2580
    %v2857 = vunpack.c.h.b16 %v2580
    %v2858 = vunpack.c.l.b16 %v2581
    %v2859 = vunpack.c.h.b16 %v2581
    %v2860 = vunpack.c.l.b16 %v2582
    %v2861 = vunpack.c.h.b16 %v2582
    %v2862 = vunpack.c.l.b16 %v2583
    %v2863 = vunpack.c.h.b16 %v2583
    %v2864 = vunpack.c.l.b16 %v2584
    %v2865 = vunpack.c.h.b16 %v2584
    %v2866 = vunpack.c.l.b16 %v2585
    %v2867 = vunpack.c.h.b16 %v2585
    %v2868 = vunpack.c.l.b16 %v2586
    %v2869 = vunpack.c.h.b16 %v2586
    %v2870 = vunpack.c.l.b16 %v2587
    %v2871 = vunpack.c.h.b16 %v2587
    %v2872 = vunpack.c.l.b16 %v2588
    %v2873 = vunpack.c.h.b16 %v2588
    %v2874 = vunpack.c.l.b16 %v2589
    %v2875 = vunpack.c.h.b16 %v2589
    %v2876 = vunpack.c.l.b16 %v2590
    %v2877 = vunpack.c.h.b16 %v2590
    %v2878 = vunpack.c.l.b16 %v2591
    %v2879 = vunpack.c.h.b16 %v2591
    %v2880 = vunpack.c.l.b16 %v2592
    %v2881 = vunpack.c.h.b16 %v2592
    %v2882 = vunpack.c.l.b16 %v2593
    %v2883 = vunpack.c.h.b16 %v2593
    %v2884 = vunpack.c.l.b16 %v2594
    %v2885 = vunpack.c.h.b16 %v2594
    %v2886 = vunpack.c.l.b16 %v2595
    %v2887 = vunpack.c.h.b16 %v2595
    %v2888 = vunpack.c.l.b16 %v2596
    %v2889 = vunpack.c.h.b16 %v2596
    %v2890 = vunpack.c.l.b16 %v2597
    %v2891 = vunpack.c.h.b16 %v2597
    %v2892 = vunpack.c.l.b16 %v2598
    %v2893 = vunpack.c.h.b16 %v2598
    %v2894 = vunpack.c.l.b16 %v2599
    %v2895 = vunpack.c.h.b16 %v2599
    %v2896 = vunpack.c.l.b16 %v2600
    %v2897 = vunpack.c.h.b16 %v2600
    %v2898 = vunpack.c.l.b16 %v2601
    %v2899 = vunpack.c.h.b16 %v2601
    %v2900 = vunpack.c.l.b16 %v2602
    %v2901 = vunpack.c.h.b16 %v2602
    %v2902 = vunpack.c.l.b16 %v2603
    %v2903 = vunpack.c.h.b16 %v2603
    %v2904 = vunpack.c.l.b16 %v2604
    %v2905 = vunpack.c.h.b16 %v2604
    %v2906 = vunpack.c.l.b16 %v2605
    %v2907 = vunpack.c.h.b16 %v2605
    %v2908 = vunpack.c.l.b16 %v2606
    %v2909 = vunpack.c.h.b16 %v2606
    %v2910 = vunpack.c.l.b16 %v2607
    %v2911 = vunpack.c.h.b16 %v2607
    %v2912 = vunpack.c.l.b16 %v2608
    %v2913 = vunpack.c.h.b16 %v2608
    %v2914 = vunpack.c.l.b16 %v2609
    %v2915 = vunpack.c.h.b16 %v2609
    %v2916 = vunpack.c.l.b16 %v2610
    %v2917 = vunpack.c.h.b16 %v2610
    %v2918 = vunpack.c.l.b16 %v2611
    %v2919 = vunpack.c.h.b16 %v2611
    %v2920 = vunpack.c.l.b16 %v2612
    %v2921 = vunpack.c.h.b16 %v2612
    %v2922 = vunpack.c.l.b16 %v2613
    %v2923 = vunpack.c.h.b16 %v2613
    %v2924 = vunpack.c.l.b16 %v2614
    %v2925 = vunpack.c.h.b16 %v2614
    %v2926 = vunpack.c.l.b16 %v2615
    %v2927 = vunpack.c.h.b16 %v2615
    %v2928 = vunpack.c.l.b16 %v2616
    %v2929 = vunpack.c.h.b16 %v2616
    %v2930 = vunpack.c.l.b16 %v2617
    %v2931 = vunpack.c.h.b16 %v2617
    %v2932 = vunpack.c.l.b16 %v2618
    %v2933 = vunpack.c.h.b16 %v2618
    %v2934 = vunpack.c.l.b16 %v2619
    %v2935 = vunpack.c.h.b16 %v2619
    %v2936 = vunpack.c.l.b16 %v2620
    %v2937 = vunpack.c.h.b16 %v2620
    %v2938 = vunpack.c.l.b16 %v2621
    %v2939 = vunpack.c.h.b16 %v2621
    %v2940 = vunpack.c.l.b16 %v2622
    %v2941 = vunpack.c.h.b16 %v2622
    %v2942 = vunpack.c.l.b16 %v2623
    %v2943 = vunpack.c.h.b16 %v2623
    %v2944 = vunpack.c.l.b16 %v2624
    %v2945 = vunpack.c.h.b16 %v2624
    %v2946 = vunpack.c.l.b16 %v2625
    %v2947 = vunpack.c.h.b16 %v2625
    %v2948 = vunpack.c.l.b16 %v2626
    %v2949 = vunpack.c.h.b16 %v2626
    %v2950 = vunpack.c.l.b16 %v2627
    %v2951 = vunpack.c.h.b16 %v2627
    %v2952 = vunpack.c.l.b16 %v2628
    %v2953 = vunpack.c.h.b16 %v2628
    %v2954 = vunpack.c.l.b16 %v2629
    %v2955 = vunpack.c.h.b16 %v2629
    %v2956 = vunpack.c.l.b16 %v2630
    %v2957 = vunpack.c.h.b16 %v2630
    %v2958 = vunpack.c.l.b16 %v2631
    %v2959 = vunpack.c.h.b16 %v2631
    %v2960 = vunpack.c.l.b16 %v2632
    %v2961 = vunpack.c.h.b16 %v2632
    %v2962 = vunpack.c.l.b16 %v2633
    %v2963 = vunpack.c.h.b16 %v2633
    %v2964 = vunpack.c.l.b16 %v2634
    %v2965 = vunpack.c.h.b16 %v2634
    %v2966 = vunpack.c.l.b16 %v2635
    %v2967 = vunpack.c.h.b16 %v2635
    %v2968 = vunpack.c.l.b16 %v2636
    %v2969 = vunpack.c.h.b16 %v2636
    %v2970 = vunpack.c.l.b16 %v2637
    %v2971 = vunpack.c.h.b16 %v2637
    %v2972 = vunpack.c.l.b16 %v2638
    %v2973 = vunpack.c.h.b16 %v2638
    %v2974 = vunpack.c.l.b16 %v2639
    %v2975 = vunpack.c.h.b16 %v2639
    %v2976 = vunpack.c.l.b16 %v2640
    %v2977 = vunpack.c.h.b16 %v2640
    %v2978 = vunpack.c.l.b16 %v2641
    %v2979 = vunpack.c.h.b16 %v2641
    %v2980 = vunpack.c.l.b16 %v2642
    %v2981 = vunpack.c.h.b16 %v2642
    %v2982 = vunpack.c.l.b16 %v2643
    %v2983 = vunpack.c.h.b16 %v2643
    %v2984 = vunpack.c.l.b16 %v2644
    %v2985 = vunpack.c.h.b16 %v2644
    %v2986 = vunpack.c.l.b16 %v2645
    %v2987 = vunpack.c.h.b16 %v2645
    %v2988 = vunpack.c.l.b16 %v2646
    %v2989 = vunpack.c.h.b16 %v2646
    %v2990 = vunpack.c.l.b16 %v2647
    %v2991 = vunpack.c.h.b16 %v2647
    %v2992 = vunpack.c.l.b16 %v2648
    %v2993 = vunpack.c.h.b16 %v2648
    %v2994 = vunpack.c.l.b16 %v2649
    %v2995 = vunpack.c.h.b16 %v2649
    %v2996 = vunpack.c.l.b16 %v2650
    %v2997 = vunpack.c.h.b16 %v2650
    %v2998 = vunpack.c.l.b16 %v2651
    %v2999 = vunpack.c.h.b16 %v2651
    %v3000 = vunpack.c.l.b16 %v2652
    %v3001 = vunpack.c.h.b16 %v2652
    %v3002 = vunpack.c.l.b16 %v2653
    %v3003 = vunpack.c.h.b16 %v2653
    %v3004 = vunpack.c.l.b16 %v2654
    %v3005 = vunpack.c.h.b16 %v2654
    %v3006 = vunpack.c.l.b16 %v2655
    %v3007 = vunpack.c.h.b16 %v2655
    %v3008 = vunpack.c.l.b16 %v2656
    %v3009 = vunpack.c.h.b16 %v2656
    %v3010 = vunpack.c.l.b16 %v2657
    %v3011 = vunpack.c.h.b16 %v2657
    %v3012 = vunpack.c.l.b16 %v2658
    %v3013 = vunpack.c.h.b16 %v2658
    %v3014 = vunpack.c.l.b16 %v2659
    %v3015 = vunpack.c.h.b16 %v2659
    %v3016 = vunpack.c.l.b16 %v2660
    %v3017 = vunpack.c.h.b16 %v2660
    %v3018 = vunpack.c.l.b16 %v2661
    %v3019 = vunpack.c.h.b16 %v2661
    %v3020 = vunpack.c.l.b16 %v2662
    %v3021 = vunpack.c.h.b16 %v2662
    %v3022 = vunpack.c.l.b16 %v2663
    %v3023 = vunpack.c.h.b16 %v2663
    %v3024 = vunpack.c.l.b16 %v2664
    %v3025 = vunpack.c.h.b16 %v2664
    %v3026 = vunpack.c.l.b16 %v2665
    %v3027 = vunpack.c.h.b16 %v2665
    %v3028 = vunpack.c.l.b16 %v2666
    %v3029 = vunpack.c.h.b16 %v2666
    %v3030 = vunpack.c.l.b16 %v2667
    %v3031 = vunpack.c.h.b16 %v2667
    %v3032 = vunpack.c.l.b16 %v2668
    %v3033 = vunpack.c.h.b16 %v2668
    %v3034 = vunpack.c.l.b16 %v2669
    %v3035 = vunpack.c.h.b16 %v2669
    %v3036 = vunpack.c.l.b16 %v2670
    %v3037 = vunpack.c.h.b16 %v2670
    %v3038 = vunpack.c.l.b16 %v2671
    %v3039 = vunpack.c.h.b16 %v2671
    %v3040 = vunpack.c.l.b16 %v2672
    %v3041 = vunpack.c.h.b16 %v2672
    %v3042 = vunpack.c.l.b16 %v2673
    %v3043 = vunpack.c.h.b16 %v2673
    %v3044 = vunpack.c.l.b16 %v2674
    %v3045 = vunpack.c.h.b16 %v2674
    %v3046 = vunpack.c.l.b16 %v2675
    %v3047 = vunpack.c.h.b16 %v2675
    %v3048 = vunpack.c.l.b16 %v2676
    %v3049 = vunpack.c.h.b16 %v2676
    %v3050 = vunpack.c.l.b16 %v2677
    %v3051 = vunpack.c.h.b16 %v2677
    %v3052 = vunpack.c.l.b16 %v2678
    %v3053 = vunpack.c.h.b16 %v2678
    %v3054 = vunpack.c.l.b16 %v2679
    %v3055 = vunpack.c.h.b16 %v2679
    %v3056 = vunpack.c.l.b16 %v2680
    %v3057 = vunpack.c.h.b16 %v2680
    %v3058 = vunpack.c.l.b16 %v2681
    %v3059 = vunpack.c.h.b16 %v2681
    %v3060 = vunpack.c.l.b16 %v2682
    %v3061 = vunpack.c.h.b16 %v2682
    %v3062 = vunpack.c.l.b16 %v2683
    %v3063 = vunpack.c.h.b16 %v2683
    %v3064 = vunpack.c.l.b16 %v2684
    %v3065 = vunpack.c.h.b16 %v2684
    %v3066 = vunpack.c.l.b16 %v2685
    %v3067 = vunpack.c.h.b16 %v2685
    %v3068 = vunpack.c.l.b16 %v2686
    %v3069 = vunpack.c.h.b16 %v2686
    %v3070 = vunpack.c.l.b16 %v2687
    %v3071 = vunpack.c.h.b16 %v2687
    %v3072 = vunpack.c.l.b16 %v2688
    %v3073 = vunpack.c.h.b16 %v2688
    %v3074 = vunpack.c.l.b16 %v2689
    %v3075 = vunpack.c.h.b16 %v2689
    %v3076 = vunpack.c.l.b16 %v2690
    %v3077 = vunpack.c.h.b16 %v2690
    %v3078 = vunpack.c.l.b16 %v2691
    %v3079 = vunpack.c.h.b16 %v2691
    %v3080 = vunpack.c.l.b16 %v2692
    %v3081 = vunpack.c.h.b16 %v2692
    %v3082 = vunpack.c.l.b16 %v2693
    %v3083 = vunpack.c.h.b16 %v2693
    %v3084 = vunpack.c.l.b16 %v2694
    %v3085 = vunpack.c.h.b16 %v2694
    %v3086 = vunpack.c.l.b16 %v2695
    %v3087 = vunpack.c.h.b16 %v2695
    %v3088 = vunpack.c.l.b16 %v2696
    %v3089 = vunpack.c.h.b16 %v2696
    %v3090 = vpack.c.b16 %v2838, %v2834
    %v3091 = vpack.c.b16 %v2839, %v2835
    %v3092 = vpack.c.b16 %v2840, %v2836
    %v3093 = vpack.c.b16 %v2841, %v2837
    %v3094 = vpack.c.b16 %v2846, %v2842
    %v3095 = vpack.c.b16 %v2847, %v2843
    %v3096 = vpack.c.b16 %v2848, %v2844
    %v3097 = vpack.c.b16 %v2849, %v2845
    %v3098 = vpack.c.b16 %v2854, %v2850
    %v3099 = vpack.c.b16 %v2855, %v2851
    %v3100 = vpack.c.b16 %v2856, %v2852
    %v3101 = vpack.c.b16 %v2857, %v2853
    %v3102 = vpack.c.b16 %v2862, %v2858
    %v3103 = vpack.c.b16 %v2863, %v2859
    %v3104 = vpack.c.b16 %v2864, %v2860
    %v3105 = vpack.c.b16 %v2865, %v2861
    %v3106 = vpack.c.b16 %v2870, %v2866
    %v3107 = vpack.c.b16 %v2871, %v2867
    %v3108 = vpack.c.b16 %v2872, %v2868
    %v3109 = vpack.c.b16 %v2873, %v2869
    %v3110 = vpack.c.b16 %v2878, %v2874
    %v3111 = vpack.c.b16 %v2879, %v2875
    %v3112 = vpack.c.b16 %v2880, %v2876
    %v3113 = vpack.c.b16 %v2881, %v2877
    %v3114 = vpack.c.b16 %v2886, %v2882
    %v3115 = vpack.c.b16 %v2887, %v2883
    %v3116 = vpack.c.b16 %v2888, %v2884
    %v3117 = vpack.c.b16 %v2889, %v2885
    %v3118 = vpack.c.b16 %v2894, %v2890
    %v3119 = vpack.c.b16 %v2895, %v2891
    %v3120 = vpack.c.b16 %v2896, %v2892
    %v3121 = vpack.c.b16 %v2897, %v2893
    %v3122 = vpack.c.b16 %v2902, %v2898
    %v3123 = vpack.c.b16 %v2903, %v2899
    %v3124 = vpack.c.b16 %v2904, %v2900
    %v3125 = vpack.c.b16 %v2905, %v2901
    %v3126 = vpack.c.b16 %v2910, %v2906
    %v3127 = vpack.c.b16 %v2911, %v2907
    %v3128 = vpack.c.b16 %v2912, %v2908
    %v3129 = vpack.c.b16 %v2913, %v2909
    %v3130 = vpack.c.b16 %v2918, %v2914
    %v3131 = vpack.c.b16 %v2919, %v2915
    %v3132 = vpack.c.b16 %v2920, %v2916
    %v3133 = vpack.c.b16 %v2921, %v2917
    %v3134 = vpack.c.b16 %v2926, %v2922
    %v3135 = vpack.c.b16 %v2927, %v2923
    %v3136 = vpack.c.b16 %v2928, %v2924
    %v3137 = vpack.c.b16 %v2929, %v2925
    %v3138 = vpack.c.b16 %v2934, %v2930
    %v3139 = vpack.c.b16 %v2935, %v2931
    %v3140 = vpack.c.b16 %v2936, %v2932
    %v3141 = vpack.c.b16 %v2937, %v2933
    %v3142 = vpack.c.b16 %v2942, %v2938
    %v3143 = vpack.c.b16 %v2943, %v2939
    %v3144 = vpack.c.b16 %v2944, %v2940
    %v3145 = vpack.c.b16 %v2945, %v2941
    %v3146 = vpack.c.b16 %v2950, %v2946
    %v3147 = vpack.c.b16 %v2951, %v2947
    %v3148 = vpack.c.b16 %v2952, %v2948
    %v3149 = vpack.c.b16 %v2953, %v2949
    %v3150 = vpack.c.b16 %v2958, %v2954
    %v3151 = vpack.c.b16 %v2959, %v2955
    %v3152 = vpack.c.b16 %v2960, %v2956
    %v3153 = vpack.c.b16 %v2961, %v2957
    %v3154 = vpack.c.b16 %v2966, %v2962
    %v3155 = vpack.c.b16 %v2967, %v2963
    %v3156 = vpack.c.b16 %v2968, %v2964
    %v3157 = vpack.c.b16 %v2969, %v2965
    %v3158 = vpack.c.b16 %v2974, %v2970
    %v3159 = vpack.c.b16 %v2975, %v2971
    %v3160 = vpack.c.b16 %v2976, %v2972
    %v3161 = vpack.c.b16 %v2977, %v2973
    %v3162 = vpack.c.b16 %v2982, %v2978
    %v3163 = vpack.c.b16 %v2983, %v2979
    %v3164 = vpack.c.b16 %v2984, %v2980
    %v3165 = vpack.c.b16 %v2985, %v2981
    %v3166 = vpack.c.b16 %v2990, %v2986
    %v3167 = vpack.c.b16 %v2991, %v2987
    %v3168 = vpack.c.b16 %v2992, %v2988
    %v3169 = vpack.c.b16 %v2993, %v2989
    %v3170 = vpack.c.b16 %v2998, %v2994
    %v3171 = vpack.c.b16 %v2999, %v2995
    %v3172 = vpack.c.b16 %v3000, %v2996
    %v3173 = vpack.c.b16 %v3001, %v2997
    %v3174 = vpack.c.b16 %v3006, %v3002
    %v3175 = vpack.c.b16 %v3007, %v3003
    %v3176 = vpack.c.b16 %v3008, %v3004
    %v3177 = vpack.c.b16 %v3009, %v3005
    %v3178 = vpack.c.b16 %v3014, %v3010
    %v3179 = vpack.c.b16 %v3015, %v3011
    %v3180 = vpack.c.b16 %v3016, %v3012
    %v3181 = vpack.c.b16 %v3017, %v3013
    %v3182 = vpack.c.b16 %v3022, %v3018
    %v3183 = vpack.c.b16 %v3023, %v3019
    %v3184 = vpack.c.b16 %v3024, %v3020
    %v3185 = vpack.c.b16 %v3025, %v3021
    %v3186 = vpack.c.b16 %v3030, %v3026
    %v3187 = vpack.c.b16 %v3031, %v3027
    %v3188 = vpack.c.b16 %v3032, %v3028
    %v3189 = vpack.c.b16 %v3033, %v3029
    %v3190 = vpack.c.b16 %v3038, %v3034
    %v3191 = vpack.c.b16 %v3039, %v3035
    %v3192 = vpack.c.b16 %v3040, %v3036
    %v3193 = vpack.c.b16 %v3041, %v3037
    %v3194 = vpack.c.b16 %v3046, %v3042
    %v3195 = vpack.c.b16 %v3047, %v3043
    %v3196 = vpack.c.b16 %v3048, %v3044
    %v3197 = vpack.c.b16 %v3049, %v3045
    %v3198 = vpack.c.b16 %v3054, %v3050
    %v3199 = vpack.c.b16 %v3055, %v3051
    %v3200 = vpack.c.b16 %v3056, %v3052
    %v3201 = vpack.c.b16 %v3057, %v3053
    %v3202 = vpack.c.b16 %v3062, %v3058
    %v3203 = vpack.c.b16 %v3063, %v3059
    %v3204 = vpack.c.b16 %v3064, %v3060
    %v3205 = vpack.c.b16 %v3065, %v3061
    %v3206 = vpack.c.b16 %v3070, %v3066
    %v3207 = vpack.c.b16 %v3071, %v3067
    %v3208 = vpack.c.b16 %v3072, %v3068
    %v3209 = vpack.c.b16 %v3073, %v3069
    %v3210 = vpack.c.b16 %v3078, %v3074
    %v3211 = vpack.c.b16 %v3079, %v3075
    %v3212 = vpack.c.b16 %v3080, %v3076
    %v3213 = vpack.c.b16 %v3081, %v3077
    %v3214 = vpack.c.b16 %v3086, %v3082
    %v3215 = vpack.c.b16 %v3087, %v3083
    %v3216 = vpack.c.b16 %v3088, %v3084
    %v3217 = vpack.c.b16 %v3089, %v3085
    %3346 = vmatpush.bf16.msra.mxu0 %v3118
    %3347 = vmatpush.bf16.msra.mxu0 %v3114
    %3348 = vmatpush.bf16.msra.mxu0 %v3110
    %3349 = vmatpush.bf16.msra.mxu0 %v3106
    %3350 = vmatpush.bf16.msra.mxu0 %v3102
    %3351 = vmatpush.bf16.msra.mxu0 %v3098
    %3352 = vmatpush.bf16.msra.mxu0 %v3094
    %3353 = vmatpush.bf16.msra.mxu0 %v3090
    %3354 = vmatmul.bf16.gmra.mxu0 %v2565
    %v3355 = vpop.f32.mrf.mxu0
    %v3356 = vadd.f32 %v2698, %v3355
    %v3357 = vpop.f32.mrf.mxu0
    %3358 = vdwg.mxu0
    %3359 = vmatpush.bf16.msra.mxu0 %v3150
    %3360 = vmatpush.bf16.msra.mxu0 %v3146
    %3361 = vmatpush.bf16.msra.mxu0 %v3142
    %3362 = vmatpush.bf16.msra.mxu0 %v3138
    %3363 = vmatpush.bf16.msra.mxu0 %v3134
    %3364 = vmatpush.bf16.msra.mxu0 %v3130
    %3365 = vmatpush.bf16.msra.mxu0 %v3126
    %3366 = vmatpush.bf16.msra.mxu0 %v3122
    %3367 = vmatmul.bf16.gmra.mxu0 %v2566
    %v3368 = vpop.f32.mrf.mxu0
    %v3369 = vadd.f32 %v3356, %v3368
    %v3370 = vpop.f32.mrf.mxu0
    %3371 = vdwg.mxu0
    %3372 = vmatpush.bf16.msra.mxu0 %v3182
    %3373 = vmatpush.bf16.msra.mxu0 %v3178
    %3374 = vmatpush.bf16.msra.mxu0 %v3174
    %3375 = vmatpush.bf16.msra.mxu0 %v3170
    %3376 = vmatpush.bf16.msra.mxu0 %v3166
    %3377 = vmatpush.bf16.msra.mxu0 %v3162
    %3378 = vmatpush.bf16.msra.mxu0 %v3158
    %3379 = vmatpush.bf16.msra.mxu0 %v3154
    %3380 = vmatmul.bf16.gmra.mxu0 %v2567
    %v3381 = vpop.f32.mrf.mxu0
    %v3382 = vadd.f32 %v3369, %v3381
    %v3383 = vpop.f32.mrf.mxu0
    %3384 = vdwg.mxu0
    %3385 = vmatpush.bf16.msra.mxu0 %v3214
    %3386 = vmatpush.bf16.msra.mxu0 %v3210
    %3387 = vmatpush.bf16.msra.mxu0 %v3206
    %3388 = vmatpush.bf16.msra.mxu0 %v3202
    %3389 = vmatpush.bf16.msra.mxu0 %v3198
    %3390 = vmatpush.bf16.msra.mxu0 %v3194
    %3391 = vmatpush.bf16.msra.mxu0 %v3190
    %3392 = vmatpush.bf16.msra.mxu0 %v3186
    %3393 = vmatmul.bf16.gmra.mxu0 %v2568
    %v3394 = vpop.f32.mrf.mxu0
    %v3395 = vadd.f32 %v3382, %v3394
    %v3396 = vpop.f32.mrf.mxu0
    %3397 = vdwg.mxu0
    %3398 = vmatpush.bf16.msra.mxu0 %v3119
    %3399 = vmatpush.bf16.msra.mxu0 %v3115
    %3400 = vmatpush.bf16.msra.mxu0 %v3111
    %3401 = vmatpush.bf16.msra.mxu0 %v3107
    %3402 = vmatpush.bf16.msra.mxu0 %v3103
    %3403 = vmatpush.bf16.msra.mxu0 %v3099
    %3404 = vmatpush.bf16.msra.mxu0 %v3095
    %3405 = vmatpush.bf16.msra.mxu0 %v3091
    %3406 = vmatmul.bf16.gmra.mxu0 %v2565
    %v3407 = vpop.f32.mrf.mxu0
    %v3408 = vadd.f32 %v2699, %v3407
    %v3409 = vpop.f32.mrf.mxu0
    %3410 = vdwg.mxu0
    %3411 = vmatpush.bf16.msra.mxu0 %v3151
    %3412 = vmatpush.bf16.msra.mxu0 %v3147
    %3413 = vmatpush.bf16.msra.mxu0 %v3143
    %3414 = vmatpush.bf16.msra.mxu0 %v3139
    %3415 = vmatpush.bf16.msra.mxu0 %v3135
    %3416 = vmatpush.bf16.msra.mxu0 %v3131
    %3417 = vmatpush.bf16.msra.mxu0 %v3127
    %3418 = vmatpush.bf16.msra.mxu0 %v3123
    %3419 = vmatmul.bf16.gmra.mxu0 %v2566
    %v3420 = vpop.f32.mrf.mxu0
    %v3421 = vadd.f32 %v3408, %v3420
    %v3422 = vpop.f32.mrf.mxu0
    %3423 = vdwg.mxu0
    %3424 = vmatpush.bf16.msra.mxu0 %v3183
    %3425 = vmatpush.bf16.msra.mxu0 %v3179
    %3426 = vmatpush.bf16.msra.mxu0 %v3175
    %3427 = vmatpush.bf16.msra.mxu0 %v3171
    %3428 = vmatpush.bf16.msra.mxu0 %v3167
    %3429 = vmatpush.bf16.msra.mxu0 %v3163
    %3430 = vmatpush.bf16.msra.mxu0 %v3159
    %3431 = vmatpush.bf16.msra.mxu0 %v3155
    %3432 = vmatmul.bf16.gmra.mxu0 %v2567
    %v3433 = vpop.f32.mrf.mxu0
    %v3434 = vadd.f32 %v3421, %v3433
    %v3435 = vpop.f32.mrf.mxu0
    %3436 = vdwg.mxu0
    %3437 = vmatpush.bf16.msra.mxu0 %v3215
    %3438 = vmatpush.bf16.msra.mxu0 %v3211
    %3439 = vmatpush.bf16.msra.mxu0 %v3207
    %3440 = vmatpush.bf16.msra.mxu0 %v3203
    %3441 = vmatpush.bf16.msra.mxu0 %v3199
    %3442 = vmatpush.bf16.msra.mxu0 %v3195
    %3443 = vmatpush.bf16.msra.mxu0 %v3191
    %3444 = vmatpush.bf16.msra.mxu0 %v3187
    %3445 = vmatmul.bf16.gmra.mxu0 %v2568
    %v3446 = vpop.f32.mrf.mxu0
    %v3447 = vadd.f32 %v3434, %v3446
    %v3448 = vpop.f32.mrf.mxu0
    %3449 = vdwg.mxu0
    %3450 = vmatpush.bf16.msra.mxu0 %v3120
    %3451 = vmatpush.bf16.msra.mxu0 %v3116
    %3452 = vmatpush.bf16.msra.mxu0 %v3112
    %3453 = vmatpush.bf16.msra.mxu0 %v3108
    %3454 = vmatpush.bf16.msra.mxu0 %v3104
    %3455 = vmatpush.bf16.msra.mxu0 %v3100
    %3456 = vmatpush.bf16.msra.mxu0 %v3096
    %3457 = vmatpush.bf16.msra.mxu0 %v3092
    %3458 = vmatmul.bf16.gmra.mxu0 %v2565
    %v3459 = vpop.f32.mrf.mxu0
    %v3460 = vadd.f32 %v2700, %v3459
    %v3461 = vpop.f32.mrf.mxu0
    %3462 = vdwg.mxu0
    %3463 = vmatpush.bf16.msra.mxu0 %v3152
    %3464 = vmatpush.bf16.msra.mxu0 %v3148
    %3465 = vmatpush.bf16.msra.mxu0 %v3144
    %3466 = vmatpush.bf16.msra.mxu0 %v3140
    %3467 = vmatpush.bf16.msra.mxu0 %v3136
    %3468 = vmatpush.bf16.msra.mxu0 %v3132
    %3469 = vmatpush.bf16.msra.mxu0 %v3128
    %3470 = vmatpush.bf16.msra.mxu0 %v3124
    %3471 = vmatmul.bf16.gmra.mxu0 %v2566
    %v3472 = vpop.f32.mrf.mxu0
    %v3473 = vadd.f32 %v3460, %v3472
    %v3474 = vpop.f32.mrf.mxu0
    %3475 = vdwg.mxu0
    %3476 = vmatpush.bf16.msra.mxu0 %v3184
    %3477 = vmatpush.bf16.msra.mxu0 %v3180
    %3478 = vmatpush.bf16.msra.mxu0 %v3176
    %3479 = vmatpush.bf16.msra.mxu0 %v3172
    %3480 = vmatpush.bf16.msra.mxu0 %v3168
    %3481 = vmatpush.bf16.msra.mxu0 %v3164
    %3482 = vmatpush.bf16.msra.mxu0 %v3160
    %3483 = vmatpush.bf16.msra.mxu0 %v3156
    %3484 = vmatmul.bf16.gmra.mxu0 %v2567
    %v3485 = vpop.f32.mrf.mxu0
    %v3486 = vadd.f32 %v3473, %v3485
    %v3487 = vpop.f32.mrf.mxu0
    %3488 = vdwg.mxu0
    %3489 = vmatpush.bf16.msra.mxu0 %v3216
    %3490 = vmatpush.bf16.msra.mxu0 %v3212
    %3491 = vmatpush.bf16.msra.mxu0 %v3208
    %3492 = vmatpush.bf16.msra.mxu0 %v3204
    %3493 = vmatpush.bf16.msra.mxu0 %v3200
    %3494 = vmatpush.bf16.msra.mxu0 %v3196
    %3495 = vmatpush.bf16.msra.mxu0 %v3192
    %3496 = vmatpush.bf16.msra.mxu0 %v3188
    %3497 = vmatmul.bf16.gmra.mxu0 %v2568
    %v3498 = vpop.f32.mrf.mxu0
    %v3499 = vadd.f32 %v3486, %v3498
    %v3500 = vpop.f32.mrf.mxu0
    %3501 = vdwg.mxu0
    %3502 = vmatpush.bf16.msra.mxu0 %v3121
    %3503 = vmatpush.bf16.msra.mxu0 %v3117
    %3504 = vmatpush.bf16.msra.mxu0 %v3113
    %3505 = vmatpush.bf16.msra.mxu0 %v3109
    %3506 = vmatpush.bf16.msra.mxu0 %v3105
    %3507 = vmatpush.bf16.msra.mxu0 %v3101
    %3508 = vmatpush.bf16.msra.mxu0 %v3097
    %3509 = vmatpush.bf16.msra.mxu0 %v3093
    %3510 = vmatmul.bf16.gmra.mxu0 %v2565
    %v3511 = vpop.f32.mrf.mxu0
    %v3512 = vadd.f32 %v2701, %v3511
    %v3513 = vpop.f32.mrf.mxu0
    %3514 = vdwg.mxu0
    %3515 = vmatpush.bf16.msra.mxu0 %v3153
    %3516 = vmatpush.bf16.msra.mxu0 %v3149
    %3517 = vmatpush.bf16.msra.mxu0 %v3145
    %3518 = vmatpush.bf16.msra.mxu0 %v3141
    %3519 = vmatpush.bf16.msra.mxu0 %v3137
    %3520 = vmatpush.bf16.msra.mxu0 %v3133
    %3521 = vmatpush.bf16.msra.mxu0 %v3129
    %3522 = vmatpush.bf16.msra.mxu0 %v3125
    %3523 = vmatmul.bf16.gmra.mxu0 %v2566
    %v3524 = vpop.f32.mrf.mxu0
    %v3525 = vadd.f32 %v3512, %v3524
    %v3526 = vpop.f32.mrf.mxu0
    %3527 = vdwg.mxu0
    %3528 = vmatpush.bf16.msra.mxu0 %v3185
    %3529 = vmatpush.bf16.msra.mxu0 %v3181
    %3530 = vmatpush.bf16.msra.mxu0 %v3177
    %3531 = vmatpush.bf16.msra.mxu0 %v3173
    %3532 = vmatpush.bf16.msra.mxu0 %v3169
    %3533 = vmatpush.bf16.msra.mxu0 %v3165
    %3534 = vmatpush.bf16.msra.mxu0 %v3161
    %3535 = vmatpush.bf16.msra.mxu0 %v3157
    %3536 = vmatmul.bf16.gmra.mxu0 %v2567
    %v3537 = vpop.f32.mrf.mxu0
    %v3538 = vadd.f32 %v3525, %v3537
    %v3539 = vpop.f32.mrf.mxu0
    %3540 = vdwg.mxu0
    %3541 = vmatpush.bf16.msra.mxu0 %v3217
    %3542 = vmatpush.bf16.msra.mxu0 %v3213
    %3543 = vmatpush.bf16.msra.mxu0 %v3209
    %3544 = vmatpush.bf16.msra.mxu0 %v3205
    %3545 = vmatpush.bf16.msra.mxu0 %v3201
    %3546 = vmatpush.bf16.msra.mxu0 %v3197
    %3547 = vmatpush.bf16.msra.mxu0 %v3193
    %3548 = vmatpush.bf16.msra.mxu0 %v3189
    %3549 = vmatmul.bf16.gmra.mxu0 %v2568
    %v3550 = vpop.f32.mrf.mxu0
    %v3551 = vadd.f32 %v3538, %v3550
    %v3552 = vpop.f32.mrf.mxu0
    %3553 = vdwg.mxu0
    %v3554 = vmax.f32 %v3395, 0.0
    %v3555 = vmax.f32 %v3447, 0.0
    %v3556 = vmax.f32 %v3499, 0.0
    %v3557 = vmax.f32 %v3551, 0.0
    %v3559 = vperm.slane %v71, 0
    %v3560 = vperm.slane %v71, 1
    %v3561 = vperm.slane %v71, 2
    %v3562 = vperm.slane %v71, 3
    %v3567 = vmul.f32 %v3554, %v3559
    %v3568 = vmul.f32 %v3555, %v3560
    %v3569 = vmul.f32 %v3556, %v3561
    %v3570 = vmul.f32 %v3557, %v3562
    %v3571 = vadd.f32 %v3567, %v3568
    %v3572 = vadd.f32 %v3571, %v3569
    %v3573 = vadd.f32 %v3572, %v3570
    %3574 = vadd.xlane.f32.xlu0 %v3573
    %v3575 = vpop.xlane.xlu0 %3574
    %s3576 = sld [smem:[#allocation2]]
    %v3577 = vstv %s3576
    %v3578 = vadd.f32 %v3575, %v3577
    %v3579 = vlaneseq
    %v3580 = vshrl.u32 %v3579, 7
    %vm3581 = vcmp.lt.s32.totalorder %v3580, 4
    %v3582 = vsel %vm3581, -1.0, 1.0
    %v3583 = vmul.f32 %v3582, %v3578
    %v3584 = vmax.f32 %v3583, 0.0
    %v3585 = vand.u32 2147483647, %v3583
    %v3586 = vsub.f32 0.0, %v3585
    %v3587 = vmul.f32 %v3586, 1.442695
    %v3588 = vpow.pop %v3587
    %v3589 = vadd.f32 %v3588, 1.0
    %v3590 = vlog2.pop %v3589
    %v3591 = vmul.f32 %v3590, 0.6931472
    %v3592 = vadd.f32 %v3584, %v3591
    %vm3593 = vcmask 7168
    %v3594 = vsel %vm3593, %v3592, 0.0
    %3595 = vadd.xlane.f32.xlu0 %v3594
    %v3596 = vpop.xlane.xlu0 %3595
    %v3597 = vrot.slane %v3596, 4
    %v3598 = vadd.f32 %v3596, %v3597
    %v3599 = vrot.slane %v3598, 2
    %v3600 = vadd.f32 %v3598, %v3599
    %v3601 = vrot.slane %v3600, 1
    %v3602 = vadd.f32 %v3600, %v3601
    %s3603 = vtos %v3602
    %v3604 = vstv %s3603
    %v3605 = vmul.f32 %v3604, 0.25
    %vm3606 = vcmask 0
    %3607 = vst.msk [vmem:[#allocation9] sm:$0x1] %vm3606, %v3605
    // Predicated region
    $region34: #{loss_forward.1} parent=1 // pred_check
      _
    $region35: #{loss_forward.1} parent=1 // pred_check_branch
      %3609 = sbr.rel (0) target = $region37
    $region36: #{loss_forward.1} parent=1 // pred_region
      %3611 = vsyncadd [#allocation5], 0
      %s3613 = sshll.u32 [#allocation9], 4
      %s3614 = int_to_ptr.vmem [resolvable:$true] %s3613
      %s3615 = sshll.u32 %s5, 4
      %s3616 = int_to_ptr.hbm [resolvable:$true] %s3615
      %3618 = dma.vmem_to_hbm [thread:$0]  %s3614, 16, %s3616, [#allocation5]
    $region37: #{loss_forward.1} parent=1 // pred_fallthru
      _
    // Predicated region
    $region38: #{loss_forward.1} parent=1 // pred_check
      _
    $region39: #{loss_forward.1} parent=1 // pred_check_branch
      %3620 = sbr.rel (0) target = $region41
    $region40: #{loss_forward.1} parent=1 // pred_region
      %3622 = dma.done [#allocation5], 16
    $region41: #{loss_forward.1} parent=1 // pred_fallthru
      _
    %3623 = vsyncpa [#allocation4], 1
    %3624 = vsyncpa [#allocation7], 1
    %3625 = vsyncpa [#allocation5], 1

</llo_original>
